<compile_context>
chip_gen: v6e
topology: v6e:2x2x1
jax: 0.10.0
libtpu: 0.0.40
codegen_flags: <defaults>
</compile_context>

<pallas_src>
import functools
import math

import jax
import jax.numpy as jnp
from jax import lax
from jax.experimental import pallas as pl
from jax.experimental.pallas import tpu as pltpu

LANE = 128
SUBLANE = 8


def _round_up(v, m):
    return ((v + m - 1) // m) * m


# -----------------------------------------------------------------------------
# Kernel 1: encoder block -> per-position normalized hidden states (bf16)
# -----------------------------------------------------------------------------
def _encoder_kernel(x_ref, wqkv_ref, bqkv_ref, wo_ref, bo_ref, g_ref, beta_ref,
                    out_ref, *, h_real):
    bt, s, hp = x_ref.shape
    rows = bt * s
    x = x_ref[...].reshape(rows, hp)                              # bf16 (rows, Hp)

    # Fused Q|K|V projection: single MXU matmul with a 3*Hp-wide N dimension.
    # The 1/sqrt(H) scale is already folded into the Wq / bq slices.
    qkv = jnp.dot(x, wqkv_ref[...],
                  preferred_element_type=jnp.float32) + bqkv_ref[...]
    qb = qkv[:, 0 * hp:1 * hp].reshape(bt, s, hp).astype(jnp.bfloat16)
    kb = qkv[:, 1 * hp:2 * hp].reshape(bt, s, hp).astype(jnp.bfloat16)
    vb = qkv[:, 2 * hp:3 * hp].reshape(bt, s, hp).astype(jnp.bfloat16)

    # q @ k^T without an explicit transpose (contract last dims).
    # TODO(synk): at very small S (<32) these per-batch (S,Hp)x(Hp,S) matmuls
    # underfill the MXU; a sublane-folded / VPU formulation would be faster.
    scores = jnp.einsum('bqd,bkd->bqk', qb, kb,
                        preferred_element_type=jnp.float32)
    mx = jnp.max(scores, axis=-1, keepdims=True)
    e = jnp.exp(scores - mx)
    probs = e * pl.reciprocal(jnp.sum(e, axis=-1, keepdims=True), approx=True)
    ctx = jnp.einsum('bqk,bkd->bqd', probs.astype(jnp.bfloat16), vb,
                     preferred_element_type=jnp.float32)

    # attention output dense (skill_attention_layer.output.dense)
    attn_out = jnp.dot(ctx.reshape(rows, hp).astype(jnp.bfloat16), wo_ref[...],
                       preferred_element_type=jnp.float32) + bo_ref[...]

    # Residual: re-read x here instead of keeping the earlier load alive across
    # the whole attention block (shorter live range -> fewer spills at large bt).
    h = attn_out + x_ref[...].reshape(rows, hp).astype(jnp.float32)

    # LayerNorm over the real hidden width. Padded lanes of h are exactly 0
    # (zero-padded weights / biases), so the mean with a 1/h_real divisor is
    # exact; the lane mask keeps the two-pass variance exact as well.
    lane_valid = (jax.lax.broadcasted_iota(jnp.int32, (1, hp), 1)
                  < h_real).astype(jnp.float32)
    inv_h = 1.0 / float(h_real)
    mean = jnp.sum(h, axis=-1, keepdims=True) * inv_h
    centered = (h - mean) * lane_valid
    var = jnp.sum(centered * centered, axis=-1, keepdims=True) * inv_h
    inv = jax.lax.rsqrt(var + 1e-12)
    # gamma/beta are zero-padded -> padded lanes of h_norm stay exactly 0.
    h_norm = centered * inv * g_ref[...] + beta_ref[...]
    out_ref[...] = h_norm.reshape(bt, s, hp).astype(jnp.bfloat16)


def _encoder_vmem_bytes(bt, S, Hp, single_buffer_weights):
    rows = bt * S
    wbuf = 1 if single_buffer_weights else 2
    io = 2 * 2 * rows * Hp * 2                         # x + out blocks, double buffered, bf16
    weights = wbuf * (4 * Hp * Hp * 2 + 6 * Hp * 4)    # wqkv+wo (bf16), biases / ln (f32)
    temps = 3 * rows * Hp * 4 + 2 * rows * Hp * 4      # qkv, ctx, h (f32)
    temps += 2 * bt * S * S * 4                        # scores + probs (f32)
    return io + weights + temps


def _pick_batch_tile(B, S, Hp, target_rows=256, vmem_budget=40 * 2**20):
    """Flattened rows (bt*S) should reach the MXU height (256 on v6e/v7x; 128+
    already saturates v5e) within a VMEM budget safe on v7x's 64 MiB.  Only
    split into an even number of grid steps (v7x megacore) when each tile still
    reaches the target; never shrink tiles just to manufacture grid steps."""
    bt = B
    while bt > 1 and (B % bt != 0
                      or _encoder_vmem_bytes(bt, S, Hp, True) > vmem_budget):
        bt -= 1
    if bt == B and B % 2 == 0 and (B // 2) * S >= target_rows:
        bt = B // 2          # 2 even grid steps -> both v7x TensorCores busy
    return bt


def _encoder_call(x_pad, pparams, h_real, bt, single_buffer_weights):
    B, S, Hp = x_pad.shape
    # Grid-invariant weights/biases: single-buffer them (constant index_map is
    # never re-DMA'd, so the second pipeline buffer is pure VMEM waste).
    pm = {"pipeline_mode": pl.Buffered(1)} if single_buffer_weights else {}
    w_qkv = pl.BlockSpec((Hp, 3 * Hp), lambda b: (0, 0), **pm)
    b_qkv = pl.BlockSpec((1, 3 * Hp), lambda b: (0, 0), **pm)
    w_o = pl.BlockSpec((Hp, Hp), lambda b: (0, 0), **pm)
    v_h = pl.BlockSpec((1, Hp), lambda b: (0, 0), **pm)

    est = _encoder_vmem_bytes(bt, S, Hp, single_buffer_weights)
    vmem_limit = int(min(max(2 * est, 32 * 2**20), 48 * 2**20))

    kernel = functools.partial(_encoder_kernel, h_real=int(h_real))
    return pl.pallas_call(
        kernel,
        out_shape=jax.ShapeDtypeStruct((B, S, Hp), jnp.bfloat16),
        grid=(B // bt,),
        in_specs=[
            pl.BlockSpec((bt, S, Hp), lambda b: (b, 0, 0)),   # x
            w_qkv, b_qkv,                                     # fused Wqkv, bqkv
            w_o, v_h,                                         # Wo, bo
            v_h, v_h,                                         # ln gamma, beta
        ],
        out_specs=pl.BlockSpec((bt, S, Hp), lambda b: (b, 0, 0)),
        compiler_params=pltpu.CompilerParams(
            dimension_semantics=("parallel",),
            vmem_limit_bytes=vmem_limit),
    )(x_pad, pparams["wqkv"], pparams["bqkv"], pparams["wo"], pparams["bo"],
      pparams["ln_g"], pparams["ln_b"])


def encoder_hidden(x_pad, pparams, h_real):
    """x_pad: (B, S, Hp) bf16 (zero-padded lanes) -> h_norm (B, S, Hp) bf16."""
    B, S, Hp = x_pad.shape
    bt = _pick_batch_tile(B, S, Hp)
    try:
        return _encoder_call(x_pad, pparams, h_real, bt, True)
    except Exception:
        # TODO(synk): pl.Buffered(1) (single-buffered grid-invariant weights)
        # not accepted by this jax version; fall back to default buffering.
        return _encoder_call(x_pad, pparams, h_real, bt, False)


# -----------------------------------------------------------------------------
# Kernel 2: in-kernel gather of masked rows from HBM + tiled readout + fused CE
# -----------------------------------------------------------------------------
def _readout_ce_kernel(idx_ref, y_ref, h_hbm, wr_ref, br_ref,
                       logits_ref, loss_ref,
                       hrows, sem, m_run, l_run, t_run, loss_acc,
                       *, c_real, m_real, tm, tc):
    m = pl.program_id(0)
    c = pl.program_id(1)
    last_m = pl.num_programs(0) - 1
    last_c = pl.num_programs(1) - 1

    # Gather this M-tile's masked rows straight from kernel 1's output in HBM
    # (scalar-prefetched flat row indices, manual DMA), once per M tile.
    @pl.when(c == 0)
    def _():
        base = m * tm

        def _start(i, carry):
            row = idx_ref[base + i]
            pltpu.make_async_copy(h_hbm.at[pl.ds(row, 1)],
                                  hrows.at[pl.ds(i, 1)], sem.at[0]).start()
            return carry

        def _wait(i, carry):
            row = idx_ref[base + i]
            pltpu.make_async_copy(h_hbm.at[pl.ds(row, 1)],
                                  hrows.at[pl.ds(i, 1)], sem.at[0]).wait()
            return carry

        lax.fori_loop(0, tm, _start, 0)
        lax.fori_loop(0, tm, _wait, 0)
        m_run[...] = jnp.full((tm, 1), -1e30, jnp.float32)
        l_run[...] = jnp.zeros((tm, 1), jnp.float32)
        t_run[...] = jnp.zeros((tm, 1), jnp.float32)

    @pl.when(jnp.logical_and(m == 0, c == 0))
    def _():
        loss_acc[...] = jnp.zeros((1, 1), jnp.float32)

    # Readout logits for this (M tile, vocab tile): bf16 operands, f32 accum.
    z = jnp.dot(hrows[...], wr_ref[...],
                preferred_element_type=jnp.float32) + br_ref[...]      # (tm, tc)
    col = c * tc + jax.lax.broadcasted_iota(jnp.int32, (tm, tc), 1)
    valid_col = col < c_real
    z = jnp.where(valid_col, z, -1e30)            # mask padded vocab lanes
    logits_ref[...] = z.astype(logits_ref.dtype)  # bf16, lane-dense writeback

    # Online log-sum-exp + target-logit accumulation (no one-hot materialized).
    tile_max = jnp.max(z, axis=-1, keepdims=True)
    m_new = jnp.maximum(m_run[...], tile_max)
    e = jnp.where(valid_col, jnp.exp(z - m_new), 0.0)
    l_run[...] = (l_run[...] * jnp.exp(m_run[...] - m_new)
                  + jnp.sum(e, axis=-1, keepdims=True))
    t_run[...] = t_run[...] + jnp.sum(
        jnp.where(col == y_ref[...], z, 0.0), axis=-1, keepdims=True)
    m_run[...] = m_new

    # Finalize this M tile's NLL contribution / the whole loss.
    @pl.when(c == last_c)
    def _():
        row = m * tm + jax.lax.broadcasted_iota(jnp.int32, (tm, 1), 0)
        row_valid = (row < m_real).astype(jnp.float32)   # padded rows -> 0
        nll = (jnp.log(l_run[...]) + m_run[...] - t_run[...]) * row_valid
        loss_acc[...] = loss_acc[...] + jnp.sum(nll, axis=0, keepdims=True)

        @pl.when(m == last_m)
        def _():
            loss_ref[...] = loss_acc[...] * (1.0 / float(m_real))


def readout_ce(h_flat, row_idx, y, pparams, c_real, m_real):
    """h_flat: (B*S, Hp) bf16 (stays in HBM); row_idx/y: (Mp,) int32 (padded).
    Returns (logits (Mp, Cp) bf16, loss (1, 1) f32)."""
    Mp = row_idx.shape[0]
    Hp = h_flat.shape[1]
    Cp = pparams["wr"].shape[1]

    tm = min(Mp, 256)                     # Mp is a multiple of tm by construction
    tc = Cp
    for cand in (2048, 1024, 512, 256, 128):
        if cand <= Cp and Cp % cand == 0:
            tc = cand
            break
    n_m, n_c = Mp // tm, Cp // tc

    vmem_est = (2 * (Hp * tc + tm * tc) * 2      # wr + logits tiles (bf16, 2 buffers)
                + tm * Hp * 2 + tm * tc * 4      # gathered rows + f32 logits temp
                + 4 * tm * 4 + 2 * tc * 4)
    vmem_limit = int(min(max(2 * vmem_est, 32 * 2**20), 48 * 2**20))

    kernel = functools.partial(_readout_ce_kernel, c_real=int(c_real),
                               m_real=int(m_real), tm=tm, tc=tc)
    grid_spec = pltpu.PrefetchScalarGridSpec(
        num_scalar_prefetch=1,
        grid=(n_m, n_c),
        in_specs=[
            pl.BlockSpec((tm, 1), lambda m, c, idx: (m, 0)),     # targets
            pl.BlockSpec(memory_space=pl.ANY),                   # h_flat (HBM)
            pl.BlockSpec((Hp, tc), lambda m, c, idx: (0, c)),    # wr vocab tile
            pl.BlockSpec((1, tc), lambda m, c, idx: (0, c)),     # br vocab tile
        ],
        out_specs=(
            pl.BlockSpec((tm, tc), lambda m, c, idx: (m, c)),    # logits (bf16)
            pl.BlockSpec((1, 1), lambda m, c, idx: (0, 0)),      # loss
        ),
        scratch_shapes=[
            pltpu.VMEM((tm, Hp), jnp.bfloat16),    # gathered masked rows
            pltpu.SemaphoreType.DMA((1,)),         # gather DMA semaphore
            pltpu.VMEM((tm, 1), jnp.float32),      # running max
            pltpu.VMEM((tm, 1), jnp.float32),      # running sum-exp
            pltpu.VMEM((tm, 1), jnp.float32),      # target logit
            pltpu.VMEM((1, 1), jnp.float32),       # loss accumulator
        ])
    logits, loss = pl.pallas_call(
        kernel,
        grid_spec=grid_spec,
        out_shape=(jax.ShapeDtypeStruct((Mp, Cp), jnp.bfloat16),
                   jax.ShapeDtypeStruct((1, 1), jnp.float32)),
        compiler_params=pltpu.CompilerParams(
            dimension_semantics=("arbitrary", "arbitrary"),
            vmem_limit_bytes=vmem_limit),
    )(row_idx, y.reshape(Mp, 1), h_flat, pparams["wr"], pparams["br"])
    return logits, loss


# -----------------------------------------------------------------------------
# Parameter padding / packing
# -----------------------------------------------------------------------------
def _pad2(a, rows, cols, dtype):
    out = jnp.zeros((rows, cols), dtype)
    return out.at[:a.shape[0], :a.shape[1]].set(a.astype(dtype))


def pad_params(params, H, C):
    Hp, Cp = _round_up(H, LANE), _round_up(C, LANE)
    scale = 1.0 / math.sqrt(H)              # folded into Wq / bq (exact)
    wqkv = jnp.zeros((Hp, 3 * Hp), jnp.bfloat16)
    wqkv = wqkv.at[:H, 0 * Hp:0 * Hp + H].set((params["wq"] * scale).astype(jnp.bfloat16))
    wqkv = wqkv.at[:H, 1 * Hp:1 * Hp + H].set(params["wk"].astype(jnp.bfloat16))
    wqkv = wqkv.at[:H, 2 * Hp:2 * Hp + H].set(params["wv"].astype(jnp.bfloat16))
    bqkv = jnp.zeros((1, 3 * Hp), jnp.float32)
    bqkv = bqkv.at[:, 0 * Hp:0 * Hp + H].set((params["bq"] * scale).astype(jnp.float32))
    bqkv = bqkv.at[:, 1 * Hp:1 * Hp + H].set(params["bk"].astype(jnp.float32))
    bqkv = bqkv.at[:, 2 * Hp:2 * Hp + H].set(params["bv"].astype(jnp.float32))
    return {
        "wqkv": wqkv, "bqkv": bqkv,
        "wo": _pad2(params["wo"], Hp, Hp, jnp.bfloat16),
        "bo": _pad2(params["bo"], 1, Hp, jnp.float32),
        "ln_g": _pad2(params["ln_g"], 1, Hp, jnp.float32),    # pad -> 0
        "ln_b": _pad2(params["ln_b"], 1, Hp, jnp.float32),    # pad -> 0
        "wr": _pad2(params["wr"], Hp, Cp, jnp.bfloat16),
        "br": _pad2(params["br"], 1, Cp, jnp.float32),
    }


# -----------------------------------------------------------------------------
# Forward wrapper (matches MaskedSkillEncoder.forward semantics)
# -----------------------------------------------------------------------------
def masked_skill_encoder_forward(x, y, mask_idx, params):
    """
    x:        (B, S, H) fp32 skill embeddings
    y:        (M,) int32 targets or None
    mask_idx: (M, 2) int32 rows of (batch_index, seq_index)
    """
    B, S, H = x.shape
    C = params["wr"].shape[1]
    M = mask_idx.shape[0]
    Hp = _round_up(H, LANE)

    pparams = pad_params(params, H, C)
    x_pad = jnp.pad(x, ((0, 0), (0, 0), (0, Hp - H))).astype(jnp.bfloat16)

    h_norm = encoder_hidden(x_pad, pparams, H)            # (B, S, Hp) bf16
    h_flat = h_norm.reshape(B * S, Hp)                    # stays in HBM

    # Flat row indices of the masked positions; padding rows point at row 0 and
    # are excluded from the loss inside kernel 2 via the row-validity mask.
    M8 = _round_up(M, SUBLANE)
    tm = M8 if M8 <= 256 else 256
    Mp = _round_up(M8, tm)
    row_idx = (mask_idx[:, 0] * S + mask_idx[:, 1]).astype(jnp.int32)
    row_idx = jnp.pad(row_idx, (0, Mp - M))
    y_in = jnp.zeros((M,), jnp.int32) if y is None else y.astype(jnp.int32)
    y_in = jnp.pad(y_in, (0, Mp - M))

    logits_pad, loss = readout_ce(h_flat, row_idx, y_in, pparams, C, M)
    logits = logits_pad[:M, :C].astype(jnp.float32)

    if y is None:
        return jnp.argmax(logits, axis=1)
    return {"loss": loss[0, 0], "logits": logits}


# -----------------------------------------------------------------------------
# Deterministic parameter construction, pure-JAX reference, demo
# -----------------------------------------------------------------------------
def make_params(key, hidden, num_skills):
    ks = jax.random.split(key, 8)
    s = 0.02
    return {
        "wq": s * jax.random.normal(ks[0], (hidden, hidden), jnp.float32),
        "bq": jnp.zeros((1, hidden), jnp.float32),
        "wk": s * jax.random.normal(ks[1], (hidden, hidden), jnp.float32),
        "bk": jnp.zeros((1, hidden), jnp.float32),
        "wv": s * jax.random.normal(ks[2], (hidden, hidden), jnp.float32),
        "bv": jnp.zeros((1, hidden), jnp.float32),
        "wo": s * jax.random.normal(ks[3], (hidden, hidden), jnp.float32),
        "bo": jnp.zeros((1, hidden), jnp.float32),
        "ln_g": jnp.ones((1, hidden), jnp.float32),
        "ln_b": jnp.zeros((1, hidden), jnp.float32),
        "wr": s * jax.random.normal(ks[4], (hidden, num_skills), jnp.float32),
        "br": jnp.zeros((1, num_skills), jnp.float32),
    }


def _reference(x, y, mask_idx, params):
    H = x.shape[-1]
    q = x @ params["wq"] + params["bq"][0]
    k = x @ params["wk"] + params["bk"][0]
    v = x @ params["wv"] + params["bv"][0]
    s = jnp.einsum('bqd,bkd->bqk', q, k) / math.sqrt(H)
    p = jax.nn.softmax(s, axis=-1)
    ctx = jnp.einsum('bqk,bkd->bqd', p, v)
    attn = ctx @ params["wo"] + params["bo"][0]
    h = attn + x
    mean = h.mean(-1, keepdims=True)
    var = ((h - mean) ** 2).mean(-1, keepdims=True)
    hn = (h - mean) / jnp.sqrt(var + 1e-12) * params["ln_g"][0] + params["ln_b"][0]
    logits = hn @ params["wr"] + params["br"][0]
    g = logits[mask_idx[:, 0], mask_idx[:, 1]]
    logp = jax.nn.log_softmax(g, axis=-1)
    loss = -jnp.mean(logp[jnp.arange(g.shape[0]), y])
    return loss, g


if __name__ == "__main__":
    B, S, H, C = 2, 8, 32, 16   # batch, seq, hidden, num skills (mapping size)
    M = 4                       # number of masked positions

    key = jax.random.PRNGKey(0)
    kx, kp, ky = jax.random.split(key, 3)

    x = jax.random.normal(kx, (B, S, H), jnp.float32)
    params = make_params(kp, H, C)

    mask_idx = jnp.array([[0, 1], [0, 5], [1, 2], [1, 7]], dtype=jnp.int32)
    y = jax.random.randint(ky, (M,), 0, C, dtype=jnp.int32)

    # training-style call (y given): loss + logits
    out = masked_skill_encoder_forward(x, y, mask_idx, params)
    jax.block_until_ready(out["loss"])
    jax.block_until_ready(out["logits"])
    assert out["logits"].shape == (M, C)
    assert out["loss"].shape == ()

    # numerical sanity vs pure-JAX fp32 reference (bf16 MXU -> loose tolerance)
    ref_loss, ref_logits = _reference(x, y, mask_idx, params)
    assert jnp.allclose(out["logits"], ref_logits, atol=5e-2, rtol=5e-2)
    assert jnp.allclose(out["loss"], ref_loss, atol=5e-2, rtol=5e-2)
    assert bool(jnp.isfinite(out["loss"]))

    # inference-style call (y is None): argmax predictions
    preds = masked_skill_encoder_forward(x, None, mask_idx, params)
    jax.block_until_ready(preds)
    assert preds.shape == (M,)
    assert bool(jnp.all((preds >= 0) & (preds < C)))

    print("KERNEL_OK")
</pallas_src>

<mosaic_0001>
module attributes {stable_mosaic.version = 11 : i64} {
  func.func @_encoder_kernel(%arg0: i32, %arg1: memref<2x8x128xbf16, #tpu.memory_space<vmem>>, %arg2: memref<128x384xbf16, #tpu.memory_space<vmem>>, %arg3: memref<1x384xf32, #tpu.memory_space<vmem>>, %arg4: memref<128x128xbf16, #tpu.memory_space<vmem>>, %arg5: memref<1x128xf32, #tpu.memory_space<vmem>>, %arg6: memref<1x128xf32, #tpu.memory_space<vmem>>, %arg7: memref<1x128xf32, #tpu.memory_space<vmem>>, %arg8: memref<2x8x128xbf16, #tpu.memory_space<vmem>>) attributes {dimension_semantics = [#tpu.dimension_semantics<parallel>], iteration_bounds = array<i64: 1>, scalar_prefetch = 0 : i64, scratch_operands = 0 : i64, tpu.core_type = #tpu.core_type<tc>, window_params = [{transform_indices = @transform_0, window_bounds = array<i64: 2, 8, 128>}, {pipeline_mode = #tpu.pipeline_mode<synchronous>, transform_indices = @transform_1, window_bounds = array<i64: 128, 384>}, {pipeline_mode = #tpu.pipeline_mode<synchronous>, transform_indices = @transform_2, window_bounds = array<i64: 1, 384>}, {pipeline_mode = #tpu.pipeline_mode<synchronous>, transform_indices = @transform_3, window_bounds = array<i64: 128, 128>}, {pipeline_mode = #tpu.pipeline_mode<synchronous>, transform_indices = @transform_4, window_bounds = array<i64: 1, 128>}, {pipeline_mode = #tpu.pipeline_mode<synchronous>, transform_indices = @transform_5, window_bounds = array<i64: 1, 128>}, {pipeline_mode = #tpu.pipeline_mode<synchronous>, transform_indices = @transform_6, window_bounds = array<i64: 1, 128>}, {transform_indices = @transform_7, window_bounds = array<i64: 2, 8, 128>}]} {
    %c0 = arith.constant 0 : index
    %c0_0 = arith.constant 0 : index
    %c0_1 = arith.constant 0 : index
    %0 = vector.load %arg1[%c0, %c0_0, %c0_1] : memref<2x8x128xbf16, #tpu.memory_space<vmem>>, vector<2x8x128xbf16>
    %1 = vector.shape_cast %0 : vector<2x8x128xbf16> to vector<16x128xbf16>
    %c0_2 = arith.constant 0 : index
    %c0_3 = arith.constant 0 : index
    %2 = vector.load %arg2[%c0_2, %c0_3] : memref<128x384xbf16, #tpu.memory_space<vmem>>, vector<128x384xbf16>
    %cst = arith.constant dense<0.000000e+00> : vector<16x384xf32>
    %3 = tpu.matmul %1, %2, %cst {dimension_numbers = #tpu.dot_dimension_numbers<[1], [0], [0], [1], [0, 0, 1, 1], [], []>} : vector<16x128xbf16>, vector<128x384xbf16>, vector<16x384xf32> -> vector<16x384xf32>
    %c0_4 = arith.constant 0 : index
    %c0_5 = arith.constant 0 : index
    %4 = vector.load %arg3[%c0_4, %c0_5] : memref<1x384xf32, #tpu.memory_space<vmem>>, vector<1x384xf32>
    %5 = vector.broadcast %4 : vector<1x384xf32> to vector<16x384xf32>
    %6 = arith.addf %3, %5 : vector<16x384xf32>
    %7 = vector.extract_strided_slice %6 {offsets = [0, 0], sizes = [16, 128], strides = [1, 1]} : vector<16x384xf32> to vector<16x128xf32>
    %8 = vector.shape_cast %7 : vector<16x128xf32> to vector<2x8x128xf32>
    %9 = arith.truncf %8 : vector<2x8x128xf32> to vector<2x8x128xbf16>
    %10 = vector.extract_strided_slice %6 {offsets = [0, 128], sizes = [16, 128], strides = [1, 1]} : vector<16x384xf32> to vector<16x128xf32>
    %11 = vector.shape_cast %10 : vector<16x128xf32> to vector<2x8x128xf32>
    %12 = arith.truncf %11 : vector<2x8x128xf32> to vector<2x8x128xbf16>
    %13 = vector.extract_strided_slice %6 {offsets = [0, 256], sizes = [16, 128], strides = [1, 1]} : vector<16x384xf32> to vector<16x128xf32>
    %14 = vector.shape_cast %13 : vector<16x128xf32> to vector<2x8x128xf32>
    %15 = arith.truncf %14 : vector<2x8x128xf32> to vector<2x8x128xbf16>
    "tpu.trace_start"() <{level = 10 : i32, message = "bqd,bkd->bqk"}> : () -> ()
    %cst_6 = arith.constant dense<0.000000e+00> : vector<2x8x8xf32>
    %16 = tpu.matmul %9, %12, %cst_6 {dimension_numbers = #tpu.dot_dimension_numbers<[2], [2], [1], [1], [0, 0, 0, 1, 1, 1], [0], [0]>} : vector<2x8x128xbf16>, vector<2x8x128xbf16>, vector<2x8x8xf32> -> vector<2x8x8xf32>
    "tpu.trace_stop"() : () -> ()
    %cst_7 = arith.constant dense<0xFF800000> : vector<2x8xf32>
    %17 = vector.multi_reduction <maximumf>, %16, %cst_7 [2] : vector<2x8x8xf32> to vector<2x8xf32>
    %18 = vector.shape_cast %17 : vector<2x8xf32> to vector<2x8x1xf32>
    %19 = vector.broadcast %18 : vector<2x8x1xf32> to vector<2x8x8xf32>
    %20 = arith.subf %16, %19 : vector<2x8x8xf32>
    %21 = math.exp %20 : vector<2x8x8xf32>
    %cst_8 = arith.constant dense<0.000000e+00> : vector<2x8xf32>
    %22 = vector.multi_reduction <add>, %21, %cst_8 [2] : vector<2x8x8xf32> to vector<2x8xf32>
    %23 = vector.shape_cast %22 : vector<2x8xf32> to vector<2x8x1xf32>
    %24 = tpu.reciprocal %23 {approx = true} : vector<2x8x1xf32> -> vector<2x8x1xf32>
    %25 = vector.broadcast %24 : vector<2x8x1xf32> to vector<2x8x8xf32>
    %26 = arith.mulf %21, %25 : vector<2x8x8xf32>
    %27 = arith.truncf %26 : vector<2x8x8xf32> to vector<2x8x8xbf16>
    "tpu.trace_start"() <{level = 10 : i32, message = "bqk,bkd->bqd"}> : () -> ()
    %cst_9 = arith.constant dense<0.000000e+00> : vector<2x8x128xf32>
    %28 = tpu.matmul %27, %15, %cst_9 {dimension_numbers = #tpu.dot_dimension_numbers<[2], [1], [1], [2], [0, 0, 0, 1, 1, 2], [0], [0]>} : vector<2x8x8xbf16>, vector<2x8x128xbf16>, vector<2x8x128xf32> -> vector<2x8x128xf32>
    "tpu.trace_stop"() : () -> ()
    %29 = vector.shape_cast %28 : vector<2x8x128xf32> to vector<16x128xf32>
    %30 = arith.truncf %29 : vector<16x128xf32> to vector<16x128xbf16>
    %c0_10 = arith.constant 0 : index
    %c0_11 = arith.constant 0 : index
    %31 = vector.load %arg4[%c0_10, %c0_11] : memref<128x128xbf16, #tpu.memory_space<vmem>>, vector<128x128xbf16>
    %cst_12 = arith.constant dense<0.000000e+00> : vector<16x128xf32>
    %32 = tpu.matmul %30, %31, %cst_12 {dimension_numbers = #tpu.dot_dimension_numbers<[1], [0], [0], [1], [0, 0, 1, 1], [], []>} : vector<16x128xbf16>, vector<128x128xbf16>, vector<16x128xf32> -> vector<16x128xf32>
    %c0_13 = arith.constant 0 : index
    %c0_14 = arith.constant 0 : index
    %33 = vector.load %arg5[%c0_13, %c0_14] : memref<1x128xf32, #tpu.memory_space<vmem>>, vector<1x128xf32>
    %34 = vector.broadcast %33 : vector<1x128xf32> to vector<16x128xf32>
    %35 = arith.addf %32, %34 : vector<16x128xf32>
    %c0_15 = arith.constant 0 : index
    %c0_16 = arith.constant 0 : index
    %c0_17 = arith.constant 0 : index
    %36 = vector.load %arg1[%c0_15, %c0_16, %c0_17] : memref<2x8x128xbf16, #tpu.memory_space<vmem>>, vector<2x8x128xbf16>
    %37 = vector.shape_cast %36 : vector<2x8x128xbf16> to vector<16x128xbf16>
    %38 = arith.extf %37 : vector<16x128xbf16> to vector<16x128xf32>
    %39 = arith.addf %35, %38 : vector<16x128xf32>
    %40 = tpu.iota {dimensions = array<i32: 1>} : vector<1x128xi32>
    %c32_i32 = arith.constant 32 : i32
    %41 = vector.broadcast %c32_i32 : i32 to vector<1x128xi32>
    %42 = arith.cmpi slt, %40, %41 : vector<1x128xi32>
    %43 = arith.extui %42 : vector<1x128xi1> to vector<1x128xi32>
    %44 = arith.sitofp %43 : vector<1x128xi32> to vector<1x128xf32>
    %cst_18 = arith.constant dense<0.000000e+00> : vector<16xf32>
    %45 = vector.multi_reduction <add>, %39, %cst_18 [1] : vector<16x128xf32> to vector<16xf32>
    %46 = vector.shape_cast %45 : vector<16xf32> to vector<16x1xf32>
    %cst_19 = arith.constant 3.125000e-02 : f32
    %47 = vector.broadcast %cst_19 : f32 to vector<16x1xf32>
    %48 = arith.mulf %46, %47 : vector<16x1xf32>
    %49 = vector.broadcast %48 : vector<16x1xf32> to vector<16x128xf32>
    %50 = arith.subf %39, %49 : vector<16x128xf32>
    %51 = vector.broadcast %44 : vector<1x128xf32> to vector<16x128xf32>
    %52 = arith.mulf %50, %51 : vector<16x128xf32>
    %53 = arith.mulf %52, %52 : vector<16x128xf32>
    %cst_20 = arith.constant dense<0.000000e+00> : vector<16xf32>
    %54 = vector.multi_reduction <add>, %53, %cst_20 [1] : vector<16x128xf32> to vector<16xf32>
    %55 = vector.shape_cast %54 : vector<16xf32> to vector<16x1xf32>
    %cst_21 = arith.constant 3.125000e-02 : f32
    %56 = vector.broadcast %cst_21 : f32 to vector<16x1xf32>
    %57 = arith.mulf %55, %56 : vector<16x1xf32>
    %cst_22 = arith.constant 9.99999996E-13 : f32
    %58 = vector.broadcast %cst_22 : f32 to vector<16x1xf32>
    %59 = arith.addf %57, %58 : vector<16x1xf32>
    %60 = math.rsqrt %59 : vector<16x1xf32>
    %61 = vector.broadcast %60 : vector<16x1xf32> to vector<16x128xf32>
    %62 = arith.mulf %52, %61 : vector<16x128xf32>
    %c0_23 = arith.constant 0 : index
    %c0_24 = arith.constant 0 : index
    %63 = vector.load %arg6[%c0_23, %c0_24] : memref<1x128xf32, #tpu.memory_space<vmem>>, vector<1x128xf32>
    %64 = vector.broadcast %63 : vector<1x128xf32> to vector<16x128xf32>
    %65 = arith.mulf %62, %64 : vector<16x128xf32>
    %c0_25 = arith.constant 0 : index
    %c0_26 = arith.constant 0 : index
    %66 = vector.load %arg7[%c0_25, %c0_26] : memref<1x128xf32, #tpu.memory_space<vmem>>, vector<1x128xf32>
    %67 = vector.broadcast %66 : vector<1x128xf32> to vector<16x128xf32>
    %68 = arith.addf %65, %67 : vector<16x128xf32>
    %69 = vector.shape_cast %68 : vector<16x128xf32> to vector<2x8x128xf32>
    %70 = arith.truncf %69 : vector<2x8x128xf32> to vector<2x8x128xbf16>
    %c0_27 = arith.constant 0 : index
    %c0_28 = arith.constant 0 : index
    %c0_29 = arith.constant 0 : index
    %71 = vector.load %arg8[%c0_27, %c0_28, %c0_29] : memref<2x8x128xbf16, #tpu.memory_space<vmem>>, vector<2x8x128xbf16>
    tpu.vector_store %arg8[%c0_27, %c0_28, %c0_29], %70 {strides = array<i32>} : memref<2x8x128xbf16, #tpu.memory_space<vmem>>, vector<2x8x128xbf16>,
    return
  }
  func.func @transform_0(%arg0: i32) -> (i32, i32, i32) {
    %c0_i32 = arith.constant 0 : i32
    %c0_i32_0 = arith.constant 0 : i32
    %c0_i32_1 = arith.constant 0 : i32
    return %arg0, %c0_i32, %c0_i32_0 : i32, i32, i32
  }
  func.func @transform_1(%arg0: i32) -> (i32, i32) {
    %c0_i32 = arith.constant 0 : i32
    %c0_i32_0 = arith.constant 0 : i32
    %c0_i32_1 = arith.constant 0 : i32
    return %c0_i32, %c0_i32_0 : i32, i32
  }
  func.func @transform_2(%arg0: i32) -> (i32, i32) {
    %c0_i32 = arith.constant 0 : i32
    %c0_i32_0 = arith.constant 0 : i32
    %c0_i32_1 = arith.constant 0 : i32
    return %c0_i32, %c0_i32_0 : i32, i32
  }
  func.func @transform_3(%arg0: i32) -> (i32, i32) {
    %c0_i32 = arith.constant 0 : i32
    %c0_i32_0 = arith.constant 0 : i32
    %c0_i32_1 = arith.constant 0 : i32
    return %c0_i32, %c0_i32_0 : i32, i32
  }
  func.func @transform_4(%arg0: i32) -> (i32, i32) {
    %c0_i32 = arith.constant 0 : i32
    %c0_i32_0 = arith.constant 0 : i32
    %c0_i32_1 = arith.constant 0 : i32
    return %c0_i32, %c0_i32_0 : i32, i32
  }
  func.func @transform_5(%arg0: i32) -> (i32, i32) {
    %c0_i32 = arith.constant 0 : i32
    %c0_i32_0 = arith.constant 0 : i32
    %c0_i32_1 = arith.constant 0 : i32
    return %c0_i32, %c0_i32_0 : i32, i32
  }
  func.func @transform_6(%arg0: i32) -> (i32, i32) {
    %c0_i32 = arith.constant 0 : i32
    %c0_i32_0 = arith.constant 0 : i32
    %c0_i32_1 = arith.constant 0 : i32
    return %c0_i32, %c0_i32_0 : i32, i32
  }
  func.func @transform_7(%arg0: i32) -> (i32, i32, i32) {
    %c0_i32 = arith.constant 0 : i32
    %c0_i32_0 = arith.constant 0 : i32
    %c0_i32_1 = arith.constant 0 : i32
    return %arg0, %c0_i32, %c0_i32_0 : i32, i32, i32
  }
}

module attributes {stable_mosaic.version = 11 : i64} {
  func.func @_encoder_kernel(%arg0: i32, %arg1: memref<2x8x128xbf16, #tpu.memory_space<vmem>>, %arg2: memref<128x384xbf16, #tpu.memory_space<vmem>>, %arg3: memref<1x384xf32, #tpu.memory_space<vmem>>, %arg4: memref<128x128xbf16, #tpu.memory_space<vmem>>, %arg5: memref<1x128xf32, #tpu.memory_space<vmem>>, %arg6: memref<1x128xf32, #tpu.memory_space<vmem>>, %arg7: memref<1x128xf32, #tpu.memory_space<vmem>>, %arg8: memref<2x8x128xbf16, #tpu.memory_space<vmem>>) attributes {dimension_semantics = [#tpu.dimension_semantics<parallel>], iteration_bounds = array<i64: 1>, scalar_prefetch = 0 : i64, scratch_operands = 0 : i64, tpu.core_type = #tpu.core_type<tc>, window_params = [{transform_indices = @transform_0, window_bounds = array<i64: 2, 8, 128>}, {pipeline_mode = #tpu.pipeline_mode<synchronous>, transform_indices = @transform_1, window_bounds = array<i64: 128, 384>}, {pipeline_mode = #tpu.pipeline_mode<synchronous>, transform_indices = @transform_2, window_bounds = array<i64: 1, 384>}, {pipeline_mode = #tpu.pipeline_mode<synchronous>, transform_indices = @transform_3, window_bounds = array<i64: 128, 128>}, {pipeline_mode = #tpu.pipeline_mode<synchronous>, transform_indices = @transform_4, window_bounds = array<i64: 1, 128>}, {pipeline_mode = #tpu.pipeline_mode<synchronous>, transform_indices = @transform_5, window_bounds = array<i64: 1, 128>}, {pipeline_mode = #tpu.pipeline_mode<synchronous>, transform_indices = @transform_6, window_bounds = array<i64: 1, 128>}, {transform_indices = @transform_7, window_bounds = array<i64: 2, 8, 128>}]} {
    %c0 = arith.constant 0 : index
    %c0_0 = arith.constant 0 : index
    %c0_1 = arith.constant 0 : index
    %0 = vector.load %arg1[%c0, %c0_0, %c0_1] : memref<2x8x128xbf16, #tpu.memory_space<vmem>>, vector<2x8x128xbf16>
    %1 = vector.shape_cast %0 : vector<2x8x128xbf16> to vector<16x128xbf16>
    %c0_2 = arith.constant 0 : index
    %c0_3 = arith.constant 0 : index
    %2 = vector.load %arg2[%c0_2, %c0_3] : memref<128x384xbf16, #tpu.memory_space<vmem>>, vector<128x384xbf16>
    %cst = arith.constant dense<0.000000e+00> : vector<16x384xf32>
    %3 = tpu.matmul %1, %2, %cst {dimension_numbers = #tpu.dot_dimension_numbers<[1], [0], [0], [1], [0, 0, 1, 1], [], []>} : vector<16x128xbf16>, vector<128x384xbf16>, vector<16x384xf32> -> vector<16x384xf32>
    %c0_4 = arith.constant 0 : index
    %c0_5 = arith.constant 0 : index
    %4 = vector.load %arg3[%c0_4, %c0_5] : memref<1x384xf32, #tpu.memory_space<vmem>>, vector<1x384xf32>
    %5 = vector.broadcast %4 : vector<1x384xf32> to vector<16x384xf32>
    %6 = arith.addf %3, %5 : vector<16x384xf32>
    %7 = vector.extract_strided_slice %6 {offsets = [0, 0], sizes = [16, 128], strides = [1, 1]} : vector<16x384xf32> to vector<16x128xf32>
    %8 = vector.shape_cast %7 : vector<16x128xf32> to vector<2x8x128xf32>
    %9 = arith.truncf %8 : vector<2x8x128xf32> to vector<2x8x128xbf16>
    %10 = vector.extract_strided_slice %6 {offsets = [0, 128], sizes = [16, 128], strides = [1, 1]} : vector<16x384xf32> to vector<16x128xf32>
    %11 = vector.shape_cast %10 : vector<16x128xf32> to vector<2x8x128xf32>
    %12 = arith.truncf %11 : vector<2x8x128xf32> to vector<2x8x128xbf16>
    %13 = vector.extract_strided_slice %6 {offsets = [0, 256], sizes = [16, 128], strides = [1, 1]} : vector<16x384xf32> to vector<16x128xf32>
    %14 = vector.shape_cast %13 : vector<16x128xf32> to vector<2x8x128xf32>
    %15 = arith.truncf %14 : vector<2x8x128xf32> to vector<2x8x128xbf16>
    "tpu.trace_start"() <{level = 10 : i32, message = "bqd,bkd->bqk"}> : () -> ()
    %cst_6 = arith.constant dense<0.000000e+00> : vector<2x8x8xf32>
    %16 = tpu.matmul %9, %12, %cst_6 {dimension_numbers = #tpu.dot_dimension_numbers<[2], [2], [1], [1], [0, 0, 0, 1, 1, 1], [0], [0]>} : vector<2x8x128xbf16>, vector<2x8x128xbf16>, vector<2x8x8xf32> -> vector<2x8x8xf32>
    "tpu.trace_stop"() : () -> ()
    %cst_7 = arith.constant dense<0xFF800000> : vector<2x8xf32>
    %17 = vector.multi_reduction <maximumf>, %16, %cst_7 [2] : vector<2x8x8xf32> to vector<2x8xf32>
    %18 = vector.shape_cast %17 : vector<2x8xf32> to vector<2x8x1xf32>
    %19 = vector.broadcast %18 : vector<2x8x1xf32> to vector<2x8x8xf32>
    %20 = arith.subf %16, %19 : vector<2x8x8xf32>
    %21 = math.exp %20 : vector<2x8x8xf32>
    %cst_8 = arith.constant dense<0.000000e+00> : vector<2x8xf32>
    %22 = vector.multi_reduction <add>, %21, %cst_8 [2] : vector<2x8x8xf32> to vector<2x8xf32>
    %23 = vector.shape_cast %22 : vector<2x8xf32> to vector<2x8x1xf32>
    %24 = tpu.reciprocal %23 {approx = true} : vector<2x8x1xf32> -> vector<2x8x1xf32>
    %25 = vector.broadcast %24 : vector<2x8x1xf32> to vector<2x8x8xf32>
    %26 = arith.mulf %21, %25 : vector<2x8x8xf32>
    %27 = arith.truncf %26 : vector<2x8x8xf32> to vector<2x8x8xbf16>
    "tpu.trace_start"() <{level = 10 : i32, message = "bqk,bkd->bqd"}> : () -> ()
    %cst_9 = arith.constant dense<0.000000e+00> : vector<2x8x128xf32>
    %28 = tpu.matmul %27, %15, %cst_9 {dimension_numbers = #tpu.dot_dimension_numbers<[2], [1], [1], [2], [0, 0, 0, 1, 1, 2], [0], [0]>} : vector<2x8x8xbf16>, vector<2x8x128xbf16>, vector<2x8x128xf32> -> vector<2x8x128xf32>
    "tpu.trace_stop"() : () -> ()
    %29 = vector.shape_cast %28 : vector<2x8x128xf32> to vector<16x128xf32>
    %30 = arith.truncf %29 : vector<16x128xf32> to vector<16x128xbf16>
    %c0_10 = arith.constant 0 : index
    %c0_11 = arith.constant 0 : index
    %31 = vector.load %arg4[%c0_10, %c0_11] : memref<128x128xbf16, #tpu.memory_space<vmem>>, vector<128x128xbf16>
    %cst_12 = arith.constant dense<0.000000e+00> : vector<16x128xf32>
    %32 = tpu.matmul %30, %31, %cst_12 {dimension_numbers = #tpu.dot_dimension_numbers<[1], [0], [0], [1], [0, 0, 1, 1], [], []>} : vector<16x128xbf16>, vector<128x128xbf16>, vector<16x128xf32> -> vector<16x128xf32>
    %c0_13 = arith.constant 0 : index
    %c0_14 = arith.constant 0 : index
    %33 = vector.load %arg5[%c0_13, %c0_14] : memref<1x128xf32, #tpu.memory_space<vmem>>, vector<1x128xf32>
    %34 = vector.broadcast %33 : vector<1x128xf32> to vector<16x128xf32>
    %35 = arith.addf %32, %34 : vector<16x128xf32>
    %c0_15 = arith.constant 0 : index
    %c0_16 = arith.constant 0 : index
    %c0_17 = arith.constant 0 : index
    %36 = vector.load %arg1[%c0_15, %c0_16, %c0_17] : memref<2x8x128xbf16, #tpu.memory_space<vmem>>, vector<2x8x128xbf16>
    %37 = vector.shape_cast %36 : vector<2x8x128xbf16> to vector<16x128xbf16>
    %38 = arith.extf %37 : vector<16x128xbf16> to vector<16x128xf32>
    %39 = arith.addf %35, %38 : vector<16x128xf32>
    %40 = tpu.iota {dimensions = array<i32: 1>} : vector<1x128xi32>
    %c32_i32 = arith.constant 32 : i32
    %41 = vector.broadcast %c32_i32 : i32 to vector<1x128xi32>
    %42 = arith.cmpi slt, %40, %41 : vector<1x128xi32>
    %43 = arith.extui %42 : vector<1x128xi1> to vector<1x128xi32>
    %44 = arith.sitofp %43 : vector<1x128xi32> to vector<1x128xf32>
    %cst_18 = arith.constant dense<0.000000e+00> : vector<16xf32>
    %45 = vector.multi_reduction <add>, %39, %cst_18 [1] : vector<16x128xf32> to vector<16xf32>
    %46 = vector.shape_cast %45 : vector<16xf32> to vector<16x1xf32>
    %cst_19 = arith.constant 3.125000e-02 : f32
    %47 = vector.broadcast %cst_19 : f32 to vector<16x1xf32>
    %48 = arith.mulf %46, %47 : vector<16x1xf32>
    %49 = vector.broadcast %48 : vector<16x1xf32> to vector<16x128xf32>
    %50 = arith.subf %39, %49 : vector<16x128xf32>
    %51 = vector.broadcast %44 : vector<1x128xf32> to vector<16x128xf32>
    %52 = arith.mulf %50, %51 : vector<16x128xf32>
    %53 = arith.mulf %52, %52 : vector<16x128xf32>
    %cst_20 = arith.constant dense<0.000000e+00> : vector<16xf32>
    %54 = vector.multi_reduction <add>, %53, %cst_20 [1] : vector<16x128xf32> to vector<16xf32>
    %55 = vector.shape_cast %54 : vector<16xf32> to vector<16x1xf32>
    %cst_21 = arith.constant 3.125000e-02 : f32
    %56 = vector.broadcast %cst_21 : f32 to vector<16x1xf32>
    %57 = arith.mulf %55, %56 : vector<16x1xf32>
    %cst_22 = arith.constant 9.99999996E-13 : f32
    %58 = vector.broadcast %cst_22 : f32 to vector<16x1xf32>
    %59 = arith.addf %57, %58 : vector<16x1xf32>
    %60 = math.rsqrt %59 : vector<16x1xf32>
    %61 = vector.broadcast %60 : vector<16x1xf32> to vector<16x128xf32>
    %62 = arith.mulf %52, %61 : vector<16x128xf32>
    %c0_23 = arith.constant 0 : index
    %c0_24 = arith.constant 0 : index
    %63 = vector.load %arg6[%c0_23, %c0_24] : memref<1x128xf32, #tpu.memory_space<vmem>>, vector<1x128xf32>
    %64 = vector.broadcast %63 : vector<1x128xf32> to vector<16x128xf32>
    %65 = arith.mulf %62, %64 : vector<16x128xf32>
    %c0_25 = arith.constant 0 : index
    %c0_26 = arith.constant 0 : index
    %66 = vector.load %arg7[%c0_25, %c0_26] : memref<1x128xf32, #tpu.memory_space<vmem>>, vector<1x128xf32>
    %67 = vector.broadcast %66 : vector<1x128xf32> to vector<16x128xf32>
    %68 = arith.addf %65, %67 : vector<16x128xf32>
    %69 = vector.shape_cast %68 : vector<16x128xf32> to vector<2x8x128xf32>
    %70 = arith.truncf %69 : vector<2x8x128xf32> to vector<2x8x128xbf16>
    %c0_27 = arith.constant 0 : index
    %c0_28 = arith.constant 0 : index
    %c0_29 = arith.constant 0 : index
    %71 = vector.load %arg8[%c0_27, %c0_28, %c0_29] : memref<2x8x128xbf16, #tpu.memory_space<vmem>>, vector<2x8x128xbf16>
    tpu.vector_store %arg8[%c0_27, %c0_28, %c0_29], %70 {strides = array<i32>} : memref<2x8x128xbf16, #tpu.memory_space<vmem>>, vector<2x8x128xbf16>,
    return
  }
  func.func @transform_0(%arg0: i32) -> (i32, i32, i32) {
    %c0_i32 = arith.constant 0 : i32
    %c0_i32_0 = arith.constant 0 : i32
    %c0_i32_1 = arith.constant 0 : i32
    return %arg0, %c0_i32, %c0_i32_0 : i32, i32, i32
  }
  func.func @transform_1(%arg0: i32) -> (i32, i32) {
    %c0_i32 = arith.constant 0 : i32
    %c0_i32_0 = arith.constant 0 : i32
    %c0_i32_1 = arith.constant 0 : i32
    return %c0_i32, %c0_i32_0 : i32, i32
  }
  func.func @transform_2(%arg0: i32) -> (i32, i32) {
    %c0_i32 = arith.constant 0 : i32
    %c0_i32_0 = arith.constant 0 : i32
    %c0_i32_1 = arith.constant 0 : i32
    return %c0_i32, %c0_i32_0 : i32, i32
  }
  func.func @transform_3(%arg0: i32) -> (i32, i32) {
    %c0_i32 = arith.constant 0 : i32
    %c0_i32_0 = arith.constant 0 : i32
    %c0_i32_1 = arith.constant 0 : i32
    return %c0_i32, %c0_i32_0 : i32, i32
  }
  func.func @transform_4(%arg0: i32) -> (i32, i32) {
    %c0_i32 = arith.constant 0 : i32
    %c0_i32_0 = arith.constant 0 : i32
    %c0_i32_1 = arith.constant 0 : i32
    return %c0_i32, %c0_i32_0 : i32, i32
  }
  func.func @transform_5(%arg0: i32) -> (i32, i32) {
    %c0_i32 = arith.constant 0 : i32
    %c0_i32_0 = arith.constant 0 : i32
    %c0_i32_1 = arith.constant 0 : i32
    return %c0_i32, %c0_i32_0 : i32, i32
  }
  func.func @transform_6(%arg0: i32) -> (i32, i32) {
    %c0_i32 = arith.constant 0 : i32
    %c0_i32_0 = arith.constant 0 : i32
    %c0_i32_1 = arith.constant 0 : i32
    return %c0_i32, %c0_i32_0 : i32, i32
  }
  func.func @transform_7(%arg0: i32) -> (i32, i32, i32) {
    %c0_i32 = arith.constant 0 : i32
    %c0_i32_0 = arith.constant 0 : i32
    %c0_i32_1 = arith.constant 0 : i32
    return %arg0, %c0_i32, %c0_i32_0 : i32, i32, i32
  }
}

</mosaic_0001>

<llo_original>
// kernel: tpu_custom_call.1
$region0: #{tpu_custom_call.1}
  #allocation0 [shape = 'u32[]', space=smem, size = 0x4, offset = 0x4, fixed_abs, tag = 'smem constant byte address 0x4 - core index']
  #allocation1 [shape = 'u32[144,128]{1,0:T(1,128)}', space=vmem, size = 0x12000, scoped, tag = 'internal scratch']
  %s0 = inlined_call_operand.hbm [shape: bf16[2,8,128], index: 0, kind: input, shape index: {}]
  %s1 = inlined_call_operand.hbm [shape: bf16[128,384], index: 1, kind: input, shape index: {}]
  %s2 = inlined_call_operand.vmem [shape: f32[1,384], index: 2, kind: input, shape index: {}]
  %s3 = inlined_call_operand.hbm [shape: bf16[128,128], index: 3, kind: input, shape index: {}]
  %s4 = inlined_call_operand.vmem [shape: f32[1,128], index: 4, kind: input, shape index: {}]
  %s5 = inlined_call_operand.vmem [shape: f32[1,128], index: 5, kind: input, shape index: {}]
  %s6 = inlined_call_operand.vmem [shape: f32[1,128], index: 6, kind: input, shape index: {}]
  %s7 = inlined_call_operand.hbm [shape: bf16[2,8,128], index: 7, kind: output, shape index: {}]
  %s8 = sld [smem:[#allocation0]]
  $region50: #{tpu_custom_call.1} parent=0
    _
  %s10 = ssub.s32 1, %s8
  %s11 = scalar_select 0, %s10, %s8
  $region1: #{tpu_custom_call.1} parent=0
    #allocation2 [shape = 'u8[4096]{0}', space=vmem, size = 0x1000, scoped, tag = 'input window, operand 0, single buffered']
    #allocation3 [shape = 's32[1]{0}', space=sflag, size = 0x4, scoped, tag = 'scoped memory for tpu_custom_call.1']
    #allocation4 [shape = 's32[1]{0}', space=sflag, size = 0x4, scoped, tag = 'scoped memory for tpu_custom_call.1']
    #allocation5 [shape = 'u8[98304]{0}', space=vmem, size = 0x18000, scoped, tag = 'input window, operand 1, single buffered']
    #allocation6 [shape = 's32[1]{0}', space=sflag, size = 0x4, scoped, tag = 'scoped memory for tpu_custom_call.1']
    #allocation7 [shape = 'u8[32768]{0}', space=vmem, size = 0x8000, scoped, tag = 'input window, operand 3, single buffered']
    #allocation8 [shape = 'u8[4096]{0}', space=vmem, size = 0x1000, scoped, tag = 'output window, operand 0, single buffered']
    %12 = vsyncpa [#allocation3], 0
    %13 = vsyncpa [#allocation6], 0
    %14 = vsyncpa [#allocation4], 0
    // Predicated region
    $region2: #{tpu_custom_call.1} parent=1 // pred_check
      _
    $region3: #{tpu_custom_call.1} parent=1 // pred_check_branch
      %16 = sbr.rel (0) target = $region5
    $region4: #{tpu_custom_call.1} parent=1 // pred_region
      %s18 = ssub.s32 128, 128
      %19 = vsyncadd [#allocation3], %s18
      %s20 = sshll.u32 [#allocation2], 4
      %s21 = int_to_ptr.vmem [resolvable:$true] %s20
      %26 = dma.hbm_to_vmem [thread:$0]  %s0, 128, %s21, [#allocation3], 64, 64, 4
    $region5: #{tpu_custom_call.1} parent=1 // pred_fallthru
      _
    // Predicated region
    $region6: #{tpu_custom_call.1} parent=1 // pred_check
      _
    $region7: #{tpu_custom_call.1} parent=1 // pred_check_branch
      %28 = sbr.rel (0) target = $region9
    $region8: #{tpu_custom_call.1} parent=1 // pred_region
      %s30 = ssub.s32 3072, 3072
      %31 = vsyncadd [#allocation6], %s30
      %s32 = sshll.u32 [#allocation5], 4
      %s33 = int_to_ptr.vmem [resolvable:$true] %s32
      %38 = dma.hbm_to_vmem [thread:$0]  %s1, 3072, %s33, [#allocation6], 192, 192, 12
    $region9: #{tpu_custom_call.1} parent=1 // pred_fallthru
      _
    // Predicated region
    $region10: #{tpu_custom_call.1} parent=1 // pred_check
      _
    $region11: #{tpu_custom_call.1} parent=1 // pred_check_branch
      %40 = sbr.rel (0) target = $region13
    $region12: #{tpu_custom_call.1} parent=1 // pred_region
      _
    $region13: #{tpu_custom_call.1} parent=1 // pred_fallthru
      _
    // Predicated region
    $region14: #{tpu_custom_call.1} parent=1 // pred_check
      _
    $region15: #{tpu_custom_call.1} parent=1 // pred_check_branch
      %42 = sbr.rel (0) target = $region17
    $region16: #{tpu_custom_call.1} parent=1 // pred_region
      %s44 = ssub.s32 1024, 1024
      %45 = vsyncadd [#allocation6], %s44
      %s46 = sshll.u32 [#allocation7], 4
      %s47 = int_to_ptr.vmem [resolvable:$true] %s46
      %52 = dma.hbm_to_vmem [thread:$0]  %s3, 1024, %s47, [#allocation6], 64, 64, 4
    $region17: #{tpu_custom_call.1} parent=1 // pred_fallthru
      _
    // Predicated region
    $region18: #{tpu_custom_call.1} parent=1 // pred_check
      _
    $region19: #{tpu_custom_call.1} parent=1 // pred_check_branch
      %54 = sbr.rel (0) target = $region21
    $region20: #{tpu_custom_call.1} parent=1 // pred_region
      _
    $region21: #{tpu_custom_call.1} parent=1 // pred_fallthru
      _
    // Predicated region
    $region22: #{tpu_custom_call.1} parent=1 // pred_check
      _
    $region23: #{tpu_custom_call.1} parent=1 // pred_check_branch
      %56 = sbr.rel (0) target = $region25
    $region24: #{tpu_custom_call.1} parent=1 // pred_region
      _
    $region25: #{tpu_custom_call.1} parent=1 // pred_fallthru
      _
    // Predicated region
    $region26: #{tpu_custom_call.1} parent=1 // pred_check
      _
    $region27: #{tpu_custom_call.1} parent=1 // pred_check_branch
      %58 = sbr.rel (0) target = $region29
    $region28: #{tpu_custom_call.1} parent=1 // pred_region
      _
    $region29: #{tpu_custom_call.1} parent=1 // pred_fallthru
      _
    // Predicated region
    $region30: #{tpu_custom_call.1} parent=1 // pred_check
      _
    $region31: #{tpu_custom_call.1} parent=1 // pred_check_branch
      %60 = sbr.rel (0) target = $region33
    $region32: #{tpu_custom_call.1} parent=1 // pred_region
      %61 = dma.done [#allocation3], 128
    $region33: #{tpu_custom_call.1} parent=1 // pred_fallthru
      _
    // Predicated region
    $region34: #{tpu_custom_call.1} parent=1 // pred_check
      _
    $region35: #{tpu_custom_call.1} parent=1 // pred_check_branch
      %63 = sbr.rel (0) target = $region37
    $region36: #{tpu_custom_call.1} parent=1 // pred_region
      %64 = dma.done [#allocation6], 3072
    $region37: #{tpu_custom_call.1} parent=1 // pred_fallthru
      _
    // Predicated region
    $region38: #{tpu_custom_call.1} parent=1 // pred_check
      _
    $region39: #{tpu_custom_call.1} parent=1 // pred_check_branch
      %66 = sbr.rel (0) target = $region41
    $region40: #{tpu_custom_call.1} parent=1 // pred_region
      %67 = dma.done [#allocation6], 1024
    $region41: #{tpu_custom_call.1} parent=1 // pred_fallthru
      _
    %v69 = vld [vmem:[#allocation2] sm:$0xf]
    %v70 = vld [vmem:[#allocation2 + $0x4] sm:$0xf]
    %v71 = vld [vmem:[#allocation5] sm:$0xff]
    %v72 = vld [vmem:[#allocation5 + $0x8] sm:$0xf]
    %v73 = vld [vmem:[#allocation5 + $0xc] sm:$0xff]
    %v74 = vld [vmem:[#allocation5 + $0x14] sm:$0xf]
    %v75 = vld [vmem:[#allocation5 + $0x18] sm:$0xff]
    %v76 = vld [vmem:[#allocation5 + $0x20] sm:$0xf]
    %v77 = vld [vmem:[#allocation5 + $0x24] sm:$0xff]
    %v78 = vld [vmem:[#allocation5 + $0x2c] sm:$0xf]
    %v79 = vld [vmem:[#allocation5 + $0x30] sm:$0xff]
    %v80 = vld [vmem:[#allocation5 + $0x38] sm:$0xf]
    %v81 = vld [vmem:[#allocation5 + $0x3c] sm:$0xff]
    %v82 = vld [vmem:[#allocation5 + $0x44] sm:$0xf]
    %v83 = vld [vmem:[#allocation5 + $0x48] sm:$0xff]
    %v84 = vld [vmem:[#allocation5 + $0x50] sm:$0xf]
    %v85 = vld [vmem:[#allocation5 + $0x54] sm:$0xff]
    %v86 = vld [vmem:[#allocation5 + $0x5c] sm:$0xf]
    %v87 = vld [vmem:[#allocation5 + $0x60] sm:$0xff]
    %v88 = vld [vmem:[#allocation5 + $0x68] sm:$0xf]
    %v89 = vld [vmem:[#allocation5 + $0x6c] sm:$0xff]
    %v90 = vld [vmem:[#allocation5 + $0x74] sm:$0xf]
    %v91 = vld [vmem:[#allocation5 + $0x78] sm:$0xff]
    %v92 = vld [vmem:[#allocation5 + $0x80] sm:$0xf]
    %v93 = vld [vmem:[#allocation5 + $0x84] sm:$0xff]
    %v94 = vld [vmem:[#allocation5 + $0x8c] sm:$0xf]
    %v95 = vld [vmem:[#allocation5 + $0x90] sm:$0xff]
    %v96 = vld [vmem:[#allocation5 + $0x98] sm:$0xf]
    %v97 = vld [vmem:[#allocation5 + $0x9c] sm:$0xff]
    %v98 = vld [vmem:[#allocation5 + $0xa4] sm:$0xf]
    %v99 = vld [vmem:[#allocation5 + $0xa8] sm:$0xff]
    %v100 = vld [vmem:[#allocation5 + $0xb0] sm:$0xf]
    %v101 = vld [vmem:[#allocation5 + $0xb4] sm:$0xff]
    %v102 = vld [vmem:[#allocation5 + $0xbc] sm:$0xf]
    %v103 = vld [vmem:[%s2] sm:$0x7]
    %v105 = vlaneseq
    %v106 = vshrl.u32 %v105, 7
    %v107 = vsub.s32 0, %v106
    %v108 = vrot.slane %v103, %v107
    %v109 = vlaneseq
    %v110 = vshrl.u32 %v109, 7
    %v111 = vsub.s32 1, %v110
    %v112 = vrot.slane %v103, %v111
    %v113 = vlaneseq
    %v114 = vshrl.u32 %v113, 7
    %v115 = vsub.s32 2, %v114
    %v116 = vrot.slane %v103, %v115
    %v122 = vunpack.c.l.b16 %v69
    %v123 = vunpack.c.l.b16 %v70
    %v124 = vpack.c.b16 %v123, %v122
    %v158 = vunpack.c.l.b16 %v71
    %v159 = vunpack.c.h.b16 %v71
    %v160 = vunpack.c.l.b16 %v72
    %v161 = vunpack.c.l.b16 %v73
    %v162 = vunpack.c.h.b16 %v73
    %v163 = vunpack.c.l.b16 %v74
    %v164 = vunpack.c.l.b16 %v75
    %v165 = vunpack.c.h.b16 %v75
    %v166 = vunpack.c.l.b16 %v76
    %v167 = vunpack.c.l.b16 %v77
    %v168 = vunpack.c.h.b16 %v77
    %v169 = vunpack.c.l.b16 %v78
    %v170 = vunpack.c.l.b16 %v79
    %v171 = vunpack.c.h.b16 %v79
    %v172 = vunpack.c.l.b16 %v80
    %v173 = vunpack.c.l.b16 %v81
    %v174 = vunpack.c.h.b16 %v81
    %v175 = vunpack.c.l.b16 %v82
    %v176 = vunpack.c.l.b16 %v83
    %v177 = vunpack.c.h.b16 %v83
    %v178 = vunpack.c.l.b16 %v84
    %v179 = vunpack.c.l.b16 %v85
    %v180 = vunpack.c.h.b16 %v85
    %v181 = vunpack.c.l.b16 %v86
    %v182 = vunpack.c.l.b16 %v87
    %v183 = vunpack.c.h.b16 %v87
    %v184 = vunpack.c.l.b16 %v88
    %v185 = vunpack.c.l.b16 %v89
    %v186 = vunpack.c.h.b16 %v89
    %v187 = vunpack.c.l.b16 %v90
    %v188 = vunpack.c.l.b16 %v91
    %v189 = vunpack.c.h.b16 %v91
    %v190 = vunpack.c.l.b16 %v92
    %v191 = vunpack.c.l.b16 %v93
    %v192 = vunpack.c.h.b16 %v93
    %v193 = vunpack.c.l.b16 %v94
    %v194 = vunpack.c.l.b16 %v95
    %v195 = vunpack.c.h.b16 %v95
    %v196 = vunpack.c.l.b16 %v96
    %v197 = vunpack.c.l.b16 %v97
    %v198 = vunpack.c.h.b16 %v97
    %v199 = vunpack.c.l.b16 %v98
    %v200 = vunpack.c.l.b16 %v99
    %v201 = vunpack.c.h.b16 %v99
    %v202 = vunpack.c.l.b16 %v100
    %v203 = vunpack.c.l.b16 %v101
    %v204 = vunpack.c.h.b16 %v101
    %v205 = vunpack.c.l.b16 %v102
    %v206 = vpack.c.b16 %v161, %v158
    %v207 = vpack.c.b16 %v162, %v159
    %v208 = vpack.c.b16 %v163, %v160
    %v209 = vpack.c.b16 %v167, %v164
    %v210 = vpack.c.b16 %v168, %v165
    %v211 = vpack.c.b16 %v169, %v166
    %v212 = vpack.c.b16 %v173, %v170
    %v213 = vpack.c.b16 %v174, %v171
    %v214 = vpack.c.b16 %v175, %v172
    %v215 = vpack.c.b16 %v179, %v176
    %v216 = vpack.c.b16 %v180, %v177
    %v217 = vpack.c.b16 %v181, %v178
    %v218 = vpack.c.b16 %v185, %v182
    %v219 = vpack.c.b16 %v186, %v183
    %v220 = vpack.c.b16 %v187, %v184
    %v221 = vpack.c.b16 %v191, %v188
    %v222 = vpack.c.b16 %v192, %v189
    %v223 = vpack.c.b16 %v193, %v190
    %v224 = vpack.c.b16 %v197, %v194
    %v225 = vpack.c.b16 %v198, %v195
    %v226 = vpack.c.b16 %v199, %v196
    %v227 = vpack.c.b16 %v203, %v200
    %v228 = vpack.c.b16 %v204, %v201
    %v229 = vpack.c.b16 %v205, %v202
    %254 = vmatprep.subr.bf16.mxu0 %v228
    %255 = vmatpush1.bf16.msra.mxu0 %v227
    %256 = vmatprep.subr.bf16.mxu0 %v225
    %257 = vmatpush1.bf16.msra.mxu0 %v224
    %258 = vmatprep.subr.bf16.mxu0 %v222
    %259 = vmatpush1.bf16.msra.mxu0 %v221
    %260 = vmatprep.subr.bf16.mxu0 %v219
    %261 = vmatpush1.bf16.msra.mxu0 %v218
    %262 = vmatprep.subr.bf16.mxu0 %v216
    %263 = vmatpush1.bf16.msra.mxu0 %v215
    %264 = vmatprep.subr.bf16.mxu0 %v213
    %265 = vmatpush1.bf16.msra.mxu0 %v212
    %266 = vmatprep.subr.bf16.mxu0 %v210
    %267 = vmatpush1.bf16.msra.mxu0 %v209
    %268 = vmatprep.subr.bf16.mxu0 %v207
    %269 = vmatpush1.bf16.msra.mxu0 %v206
    %270 = vmatprep.subr.bf16.mxu0 0
    %271 = vmatpush2.bf16.msra.mxu0 0
    %272 = vmatprep.subr.bf16.mxu0 0
    %273 = vmatpush2.bf16.msra.mxu0 0
    %274 = vmatprep.subr.bf16.mxu0 0
    %275 = vmatpush2.bf16.msra.mxu0 0
    %276 = vmatprep.subr.bf16.mxu0 0
    %277 = vmatpush2.bf16.msra.mxu0 0
    %278 = vmatprep.subr.bf16.mxu0 0
    %279 = vmatpush2.bf16.msra.mxu0 0
    %280 = vmatprep.subr.bf16.mxu0 0
    %281 = vmatpush2.bf16.msra.mxu0 0
    %282 = vmatprep.subr.bf16.mxu0 0
    %283 = vmatpush2.bf16.msra.mxu0 0
    %284 = vmatprep.subr.bf16.mxu0 0
    %285 = vmatpush2.bf16.msra.mxu0 0
    %286 = vmatprep.mubr.bf16.mxu0 0
    %287 = vmatmul.mubr.bf16.gmra.mxu0 %v124
    %v288 = vpop.f32.mrf.mxu0
    %v289 = vadd.f32 %v108, %v288
    %v290 = vpop.f32.mrf.mxu0
    %v291 = vadd.f32 %v112, %v290
    %v292 = vpop.f32.mrf.mxu0
    %v293 = vadd.f32 %v108, %v292
    %v294 = vpop.f32.mrf.mxu0
    %v295 = vadd.f32 %v112, %v294
    %296 = vdwg.mxu0
    %297 = vmatprep.subr.bf16.mxu0 0
    %298 = vmatpush1.bf16.msra.mxu0 %v229
    %299 = vmatprep.subr.bf16.mxu0 0
    %300 = vmatpush1.bf16.msra.mxu0 %v226
    %301 = vmatprep.subr.bf16.mxu0 0
    %302 = vmatpush1.bf16.msra.mxu0 %v223
    %303 = vmatprep.subr.bf16.mxu0 0
    %304 = vmatpush1.bf16.msra.mxu0 %v220
    %305 = vmatprep.subr.bf16.mxu0 0
    %306 = vmatpush1.bf16.msra.mxu0 %v217
    %307 = vmatprep.subr.bf16.mxu0 0
    %308 = vmatpush1.bf16.msra.mxu0 %v214
    %309 = vmatprep.subr.bf16.mxu0 0
    %310 = vmatpush1.bf16.msra.mxu0 %v211
    %311 = vmatprep.subr.bf16.mxu0 0
    %312 = vmatpush1.bf16.msra.mxu0 %v208
    %313 = vmatprep.subr.bf16.mxu0 0
    %314 = vmatpush2.bf16.msra.mxu0 0
    %315 = vmatprep.subr.bf16.mxu0 0
    %316 = vmatpush2.bf16.msra.mxu0 0
    %317 = vmatprep.subr.bf16.mxu0 0
    %318 = vmatpush2.bf16.msra.mxu0 0
    %319 = vmatprep.subr.bf16.mxu0 0
    %320 = vmatpush2.bf16.msra.mxu0 0
    %321 = vmatprep.subr.bf16.mxu0 0
    %322 = vmatpush2.bf16.msra.mxu0 0
    %323 = vmatprep.subr.bf16.mxu0 0
    %324 = vmatpush2.bf16.msra.mxu0 0
    %325 = vmatprep.subr.bf16.mxu0 0
    %326 = vmatpush2.bf16.msra.mxu0 0
    %327 = vmatprep.subr.bf16.mxu0 0
    %328 = vmatpush2.bf16.msra.mxu0 0
    %329 = vmatprep.mubr.bf16.mxu0 0
    %330 = vmatmul.mubr.bf16.gmra.mxu0 %v124
    %v331 = vpop.f32.mrf.mxu0
    %v332 = vadd.f32 %v116, %v331
    %v333 = vpop.f32.mrf.mxu0
    %v334 = vpop.f32.mrf.mxu0
    %v335 = vadd.f32 %v116, %v334
    %v336 = vpop.f32.mrf.mxu0
    %337 = vdwg.mxu0
    %v338 = vpack.c.bf16 %v289, %v289
    %v339 = vpack.c.bf16 %v293, %v293
    %v340 = vpack.c.bf16 %v291, %v291
    %v341 = vpack.c.bf16 %v295, %v295
    %v342 = vpack.c.bf16 %v332, %v332
    %v343 = vpack.c.bf16 %v335, %v335
    %344 = vmatprep.subr.bf16.mxu0 0
    %345 = vmatpush1.bf16.xpose.msra.mxu0 0
    %346 = vmatprep.subr.bf16.mxu0 0
    %347 = vmatpush1.bf16.xpose.msra.mxu0 0
    %348 = vmatprep.subr.bf16.mxu0 0
    %349 = vmatpush1.bf16.xpose.msra.mxu0 0
    %350 = vmatprep.subr.bf16.mxu0 0
    %351 = vmatpush1.bf16.xpose.msra.mxu0 0
    %352 = vmatprep.subr.bf16.mxu0 0
    %353 = vmatpush1.bf16.xpose.msra.mxu0 0
    %354 = vmatprep.subr.bf16.mxu0 0
    %355 = vmatpush1.bf16.xpose.msra.mxu0 0
    %356 = vmatprep.subr.bf16.mxu0 0
    %357 = vmatpush1.bf16.xpose.msra.mxu0 0
    %358 = vmatprep.subr.bf16.mxu0 0
    %359 = vmatpush1.bf16.xpose.msra.mxu0 %v340
    %360 = vmatprep.subr.bf16.mxu0 0
    %361 = vmatpush2.bf16.xpose.msra.mxu0 0
    %362 = vmatprep.subr.bf16.mxu0 0
    %363 = vmatpush2.bf16.xpose.msra.mxu0 0
    %364 = vmatprep.subr.bf16.mxu0 0
    %365 = vmatpush2.bf16.xpose.msra.mxu0 0
    %366 = vmatprep.subr.bf16.mxu0 0
    %367 = vmatpush2.bf16.xpose.msra.mxu0 0
    %368 = vmatprep.subr.bf16.mxu0 0
    %369 = vmatpush2.bf16.xpose.msra.mxu0 0
    %370 = vmatprep.subr.bf16.mxu0 0
    %371 = vmatpush2.bf16.xpose.msra.mxu0 0
    %372 = vmatprep.subr.bf16.mxu0 0
    %373 = vmatpush2.bf16.xpose.msra.mxu0 0
    %374 = vmatprep.subr.bf16.mxu0 0
    %375 = vmatpush2.bf16.xpose.msra.mxu0 0
    %376 = vmatprep.mubr.bf16.mxu0 0
    %377 = vmatmul.mubr.bf16.gmra.mxu0 %v338
    %v378 = vpop.f32.mrf.mxu0
    %v379 = vadd.f32 0.0, %v378
    %v380 = vpop.f32.mrf.mxu0
    %v381 = vpop.f32.mrf.mxu0
    %v382 = vpop.f32.mrf.mxu0
    %383 = vdwg.mxu0
    %384 = vmatprep.subr.bf16.mxu0 0
    %385 = vmatpush1.bf16.xpose.msra.mxu0 0
    %386 = vmatprep.subr.bf16.mxu0 0
    %387 = vmatpush1.bf16.xpose.msra.mxu0 0
    %388 = vmatprep.subr.bf16.mxu0 0
    %389 = vmatpush1.bf16.xpose.msra.mxu0 0
    %390 = vmatprep.subr.bf16.mxu0 0
    %391 = vmatpush1.bf16.xpose.msra.mxu0 0
    %392 = vmatprep.subr.bf16.mxu0 0
    %393 = vmatpush1.bf16.xpose.msra.mxu0 0
    %394 = vmatprep.subr.bf16.mxu0 0
    %395 = vmatpush1.bf16.xpose.msra.mxu0 0
    %396 = vmatprep.subr.bf16.mxu0 0
    %397 = vmatpush1.bf16.xpose.msra.mxu0 0
    %398 = vmatprep.subr.bf16.mxu0 0
    %399 = vmatpush1.bf16.xpose.msra.mxu0 %v341
    %400 = vmatprep.subr.bf16.mxu0 0
    %401 = vmatpush2.bf16.xpose.msra.mxu0 0
    %402 = vmatprep.subr.bf16.mxu0 0
    %403 = vmatpush2.bf16.xpose.msra.mxu0 0
    %404 = vmatprep.subr.bf16.mxu0 0
    %405 = vmatpush2.bf16.xpose.msra.mxu0 0
    %406 = vmatprep.subr.bf16.mxu0 0
    %407 = vmatpush2.bf16.xpose.msra.mxu0 0
    %408 = vmatprep.subr.bf16.mxu0 0
    %409 = vmatpush2.bf16.xpose.msra.mxu0 0
    %410 = vmatprep.subr.bf16.mxu0 0
    %411 = vmatpush2.bf16.xpose.msra.mxu0 0
    %412 = vmatprep.subr.bf16.mxu0 0
    %413 = vmatpush2.bf16.xpose.msra.mxu0 0
    %414 = vmatprep.subr.bf16.mxu0 0
    %415 = vmatpush2.bf16.xpose.msra.mxu0 0
    %416 = vmatprep.mubr.bf16.mxu0 0
    %417 = vmatmul.mubr.bf16.gmra.mxu0 %v339
    %v418 = vpop.f32.mrf.mxu0
    %v419 = vadd.f32 0.0, %v418
    %v420 = vpop.f32.mrf.mxu0
    %v421 = vpop.f32.mrf.mxu0
    %v422 = vpop.f32.mrf.mxu0
    %423 = vdwg.mxu0
    %vm424 = vcmask 64512
    %v425 = vsel %vm424, %v379, -inf
    %426 = vmax.xlane.f32.xlu0 %v425
    %v427 = vpop.xlane.xlu0 %426
    %v428 = vsel %vm424, %v419, -inf
    %429 = vmax.xlane.f32.xlu0 %v428
    %v430 = vpop.xlane.xlu0 %429
    %v431 = vsub.f32 %v379, %v427
    %v432 = vsub.f32 %v419, %v430
    %v433 = vmul.f32 %v431, 1.442695
    %v434 = vpow.pop %v433
    %v435 = vmul.f32 %v432, 1.442695
    %v436 = vpow.pop %v435
    %v437 = vsel %vm424, %v434, 0.0
    %438 = vadd.xlane.f32.xlu0 %v437
    %v439 = vpop.xlane.xlu0 %438
    %v440 = vsel %vm424, %v436, 0.0
    %441 = vadd.xlane.f32.xlu0 %v440
    %v442 = vpop.xlane.xlu0 %441
    %v443 = vrcp.pop %v439
    %v444 = vrcp.pop %v442
    %v445 = vmul.f32 %v434, %v443
    %v446 = vmul.f32 %v436, %v444
    %v447 = vpack.c.bf16 %v445, %v445
    %v448 = vpack.c.bf16 %v446, %v446
    %v450 = vsel %vm424, %v447, 0
    %vm452 = vcmask 1043456
    %v454 = vsel %vm452, %v342, 0
    %456 = vmatprep.subr.bf16.mxu0 0
    %457 = vmatpush1.bf16.msra.mxu0 0
    %458 = vmatprep.subr.bf16.mxu0 0
    %459 = vmatpush1.bf16.msra.mxu0 0
    %460 = vmatprep.subr.bf16.mxu0 0
    %461 = vmatpush1.bf16.msra.mxu0 0
    %462 = vmatprep.subr.bf16.mxu0 0
    %463 = vmatpush1.bf16.msra.mxu0 0
    %464 = vmatprep.subr.bf16.mxu0 0
    %465 = vmatpush1.bf16.msra.mxu0 0
    %466 = vmatprep.subr.bf16.mxu0 0
    %467 = vmatpush1.bf16.msra.mxu0 0
    %468 = vmatprep.subr.bf16.mxu0 0
    %469 = vmatpush1.bf16.msra.mxu0 0
    %470 = vmatprep.subr.bf16.mxu0 0
    %471 = vmatpush1.bf16.msra.mxu0 %v454
    %472 = vmatprep.subr.bf16.mxu0 0
    %473 = vmatpush2.bf16.msra.mxu0 0
    %474 = vmatprep.subr.bf16.mxu0 0
    %475 = vmatpush2.bf16.msra.mxu0 0
    %476 = vmatprep.subr.bf16.mxu0 0
    %477 = vmatpush2.bf16.msra.mxu0 0
    %478 = vmatprep.subr.bf16.mxu0 0
    %479 = vmatpush2.bf16.msra.mxu0 0
    %480 = vmatprep.subr.bf16.mxu0 0
    %481 = vmatpush2.bf16.msra.mxu0 0
    %482 = vmatprep.subr.bf16.mxu0 0
    %483 = vmatpush2.bf16.msra.mxu0 0
    %484 = vmatprep.subr.bf16.mxu0 0
    %485 = vmatpush2.bf16.msra.mxu0 0
    %486 = vmatprep.subr.bf16.mxu0 0
    %487 = vmatpush2.bf16.msra.mxu0 0
    %488 = vmatprep.mubr.bf16.mxu0 0
    %489 = vmatmul.mubr.bf16.gmra.mxu0 %v450
    %v490 = vpop.f32.mrf.mxu0
    %v491 = vadd.f32 0.0, %v490
    %v492 = vpop.f32.mrf.mxu0
    %v493 = vpop.f32.mrf.mxu0
    %v494 = vpop.f32.mrf.mxu0
    %495 = vdwg.mxu0
    %v497 = vsel %vm424, %v448, 0
    %v500 = vsel %vm452, %v343, 0
    %502 = vmatprep.subr.bf16.mxu0 0
    %503 = vmatpush1.bf16.msra.mxu0 0
    %504 = vmatprep.subr.bf16.mxu0 0
    %505 = vmatpush1.bf16.msra.mxu0 0
    %506 = vmatprep.subr.bf16.mxu0 0
    %507 = vmatpush1.bf16.msra.mxu0 0
    %508 = vmatprep.subr.bf16.mxu0 0
    %509 = vmatpush1.bf16.msra.mxu0 0
    %510 = vmatprep.subr.bf16.mxu0 0
    %511 = vmatpush1.bf16.msra.mxu0 0
    %512 = vmatprep.subr.bf16.mxu0 0
    %513 = vmatpush1.bf16.msra.mxu0 0
    %514 = vmatprep.subr.bf16.mxu0 0
    %515 = vmatpush1.bf16.msra.mxu0 0
    %516 = vmatprep.subr.bf16.mxu0 0
    %517 = vmatpush1.bf16.msra.mxu0 %v500
    %518 = vmatprep.subr.bf16.mxu0 0
    %519 = vmatpush2.bf16.msra.mxu0 0
    %520 = vmatprep.subr.bf16.mxu0 0
    %521 = vmatpush2.bf16.msra.mxu0 0
    %522 = vmatprep.subr.bf16.mxu0 0
    %523 = vmatpush2.bf16.msra.mxu0 0
    %524 = vmatprep.subr.bf16.mxu0 0
    %525 = vmatpush2.bf16.msra.mxu0 0
    %526 = vmatprep.subr.bf16.mxu0 0
    %527 = vmatpush2.bf16.msra.mxu0 0
    %528 = vmatprep.subr.bf16.mxu0 0
    %529 = vmatpush2.bf16.msra.mxu0 0
    %530 = vmatprep.subr.bf16.mxu0 0
    %531 = vmatpush2.bf16.msra.mxu0 0
    %532 = vmatprep.subr.bf16.mxu0 0
    %533 = vmatpush2.bf16.msra.mxu0 0
    %534 = vmatprep.mubr.bf16.mxu0 0
    %535 = vmatmul.mubr.bf16.gmra.mxu0 %v497
    %v536 = vpop.f32.mrf.mxu0
    %v537 = vadd.f32 0.0, %v536
    %v538 = vpop.f32.mrf.mxu0
    %v539 = vpop.f32.mrf.mxu0
    %v540 = vpop.f32.mrf.mxu0
    %541 = vdwg.mxu0
    %v542 = vpack.c.bf16 %v537, %v491
    %v543 = vld [vmem:[#allocation7] sm:$0xf]
    %v544 = vld [vmem:[#allocation7 + $0x4] sm:$0xf]
    %v545 = vld [vmem:[#allocation7 + $0x8] sm:$0xf]
    %v546 = vld [vmem:[#allocation7 + $0xc] sm:$0xf]
    %v547 = vld [vmem:[#allocation7 + $0x10] sm:$0xf]
    %v548 = vld [vmem:[#allocation7 + $0x14] sm:$0xf]
    %v549 = vld [vmem:[#allocation7 + $0x18] sm:$0xf]
    %v550 = vld [vmem:[#allocation7 + $0x1c] sm:$0xf]
    %v551 = vld [vmem:[#allocation7 + $0x20] sm:$0xf]
    %v552 = vld [vmem:[#allocation7 + $0x24] sm:$0xf]
    %v553 = vld [vmem:[#allocation7 + $0x28] sm:$0xf]
    %v554 = vld [vmem:[#allocation7 + $0x2c] sm:$0xf]
    %v555 = vld [vmem:[#allocation7 + $0x30] sm:$0xf]
    %v556 = vld [vmem:[#allocation7 + $0x34] sm:$0xf]
    %v557 = vld [vmem:[#allocation7 + $0x38] sm:$0xf]
    %v558 = vld [vmem:[#allocation7 + $0x3c] sm:$0xf]
    %v559 = vld [vmem:[%s4] sm:$0x1]
    %v561 = vlaneseq
    %v562 = vshrl.u32 %v561, 7
    %v563 = vsub.s32 0, %v562
    %v564 = vrot.slane %v559, %v563
    %v582 = vunpack.c.l.b16 %v543
    %v583 = vunpack.c.l.b16 %v544
    %v584 = vunpack.c.l.b16 %v545
    %v585 = vunpack.c.l.b16 %v546
    %v586 = vunpack.c.l.b16 %v547
    %v587 = vunpack.c.l.b16 %v548
    %v588 = vunpack.c.l.b16 %v549
    %v589 = vunpack.c.l.b16 %v550
    %v590 = vunpack.c.l.b16 %v551
    %v591 = vunpack.c.l.b16 %v552
    %v592 = vunpack.c.l.b16 %v553
    %v593 = vunpack.c.l.b16 %v554
    %v594 = vunpack.c.l.b16 %v555
    %v595 = vunpack.c.l.b16 %v556
    %v596 = vunpack.c.l.b16 %v557
    %v597 = vunpack.c.l.b16 %v558
    %v598 = vpack.c.b16 %v583, %v582
    %v599 = vpack.c.b16 %v585, %v584
    %v600 = vpack.c.b16 %v587, %v586
    %v601 = vpack.c.b16 %v589, %v588
    %v602 = vpack.c.b16 %v591, %v590
    %v603 = vpack.c.b16 %v593, %v592
    %v604 = vpack.c.b16 %v595, %v594
    %v605 = vpack.c.b16 %v597, %v596
    %614 = vmatprep.subr.bf16.mxu0 0
    %615 = vmatpush1.bf16.msra.mxu0 %v605
    %616 = vmatprep.subr.bf16.mxu0 0
    %617 = vmatpush1.bf16.msra.mxu0 %v604
    %618 = vmatprep.subr.bf16.mxu0 0
    %619 = vmatpush1.bf16.msra.mxu0 %v603
    %620 = vmatprep.subr.bf16.mxu0 0
    %621 = vmatpush1.bf16.msra.mxu0 %v602
    %622 = vmatprep.subr.bf16.mxu0 0
    %623 = vmatpush1.bf16.msra.mxu0 %v601
    %624 = vmatprep.subr.bf16.mxu0 0
    %625 = vmatpush1.bf16.msra.mxu0 %v600
    %626 = vmatprep.subr.bf16.mxu0 0
    %627 = vmatpush1.bf16.msra.mxu0 %v599
    %628 = vmatprep.subr.bf16.mxu0 0
    %629 = vmatpush1.bf16.msra.mxu0 %v598
    %630 = vmatprep.subr.bf16.mxu0 0
    %631 = vmatpush2.bf16.msra.mxu0 0
    %632 = vmatprep.subr.bf16.mxu0 0
    %633 = vmatpush2.bf16.msra.mxu0 0
    %634 = vmatprep.subr.bf16.mxu0 0
    %635 = vmatpush2.bf16.msra.mxu0 0
    %636 = vmatprep.subr.bf16.mxu0 0
    %637 = vmatpush2.bf16.msra.mxu0 0
    %638 = vmatprep.subr.bf16.mxu0 0
    %639 = vmatpush2.bf16.msra.mxu0 0
    %640 = vmatprep.subr.bf16.mxu0 0
    %641 = vmatpush2.bf16.msra.mxu0 0
    %642 = vmatprep.subr.bf16.mxu0 0
    %643 = vmatpush2.bf16.msra.mxu0 0
    %644 = vmatprep.subr.bf16.mxu0 0
    %645 = vmatpush2.bf16.msra.mxu0 0
    %646 = vmatprep.mubr.bf16.mxu0 0
    %647 = vmatmul.mubr.bf16.gmra.mxu0 %v542
    %v648 = vpop.f32.mrf.mxu0
    %v649 = vadd.f32 %v564, %v648
    %v650 = vpop.f32.mrf.mxu0
    %v651 = vpop.f32.mrf.mxu0
    %v652 = vadd.f32 %v564, %v651
    %v653 = vpop.f32.mrf.mxu0
    %654 = vdwg.mxu0
    %v655 = vld [vmem:[#allocation2] sm:$0xf]
    %v656 = vld [vmem:[#allocation2 + $0x4] sm:$0xf]
    %v657 = vunpack.c.l.bf16 %v655
    %v658 = vunpack.c.l.bf16 %v656
    %v659 = vadd.f32 %v649, %v657
    %v660 = vadd.f32 %v652, %v658
    %v661 = vlaneseq
    %v662 = vand.u32 %v661, 127
    %vm663 = vcmp.lt.s32.totalorder %v662, 32
    %v664 = vsel %vm663, 1, 0
    %v665 = vcvt.s32.f32 %v664
    %666 = vadd.xlane.f32.xlu0 %v659
    %v667 = vpop.xlane.xlu0 %666
    %668 = vadd.xlane.f32.xlu0 %v660
    %v669 = vpop.xlane.xlu0 %668
    %v670 = vmul.f32 %v667, 0.03125
    %v671 = vmul.f32 %v669, 0.03125
    %v672 = vsub.f32 %v659, %v670
    %v673 = vsub.f32 %v660, %v671
    %v674 = vmul.f32 %v672, %v665
    %v675 = vmul.f32 %v673, %v665
    %v676 = vmul.f32 %v674, %v674
    %v677 = vmul.f32 %v675, %v675
    %678 = vadd.xlane.f32.xlu0 %v676
    %v679 = vpop.xlane.xlu0 %678
    %680 = vadd.xlane.f32.xlu0 %v677
    %v681 = vpop.xlane.xlu0 %680
    %v682 = vmul.f32 %v679, 0.03125
    %v683 = vmul.f32 %v681, 0.03125
    %v684 = vadd.f32 %v682, 1e-12
    %v685 = vadd.f32 %v683, 1e-12
    %v686 = vrsqrt.pop %v684
    %v687 = vrsqrt.pop %v685
    %v688 = vmul.f32 %v674, %v686
    %v689 = vmul.f32 %v675, %v687
    %v690 = vld [vmem:[%s5] sm:$0x1]
    %v692 = vlaneseq
    %v693 = vshrl.u32 %v692, 7
    %v694 = vsub.s32 0, %v693
    %v695 = vrot.slane %v690, %v694
    %v697 = vmul.f32 %v688, %v695
    %v698 = vmul.f32 %v689, %v695
    %v699 = vld [vmem:[%s6] sm:$0x1]
    %v701 = vlaneseq
    %v702 = vshrl.u32 %v701, 7
    %v703 = vsub.s32 0, %v702
    %v704 = vrot.slane %v699, %v703
    %v706 = vadd.f32 %v697, %v704
    %v707 = vadd.f32 %v698, %v704
    %v708 = vpack.c.bf16 %v706, %v706
    %v709 = vpack.c.bf16 %v707, %v707
    %710 = vst [vmem:[#allocation8] sm:$0xf] %v708
    %711 = vst [vmem:[#allocation8 + $0x4] sm:$0xf] %v709
    // Predicated region
    $region42: #{tpu_custom_call.1} parent=1 // pred_check
      _
    $region43: #{tpu_custom_call.1} parent=1 // pred_check_branch
      %713 = sbr.rel (0) target = $region45
    $region44: #{tpu_custom_call.1} parent=1 // pred_region
      %s715 = ssub.s32 128, 128
      %716 = vsyncadd [#allocation4], %s715
      %s717 = sshll.u32 [#allocation8], 4
      %s718 = int_to_ptr.vmem [resolvable:$true] %s717
      %723 = dma.vmem_to_hbm [thread:$0]  %s718, 128, %s7, [#allocation4], 64, 64, 4
    $region45: #{tpu_custom_call.1} parent=1 // pred_fallthru
      _
    // Predicated region
    $region46: #{tpu_custom_call.1} parent=1 // pred_check
      _
    $region47: #{tpu_custom_call.1} parent=1 // pred_check_branch
      %725 = sbr.rel (0) target = $region49
    $region48: #{tpu_custom_call.1} parent=1 // pred_region
      %726 = dma.done [#allocation4], 128
    $region49: #{tpu_custom_call.1} parent=1 // pred_fallthru
      _
    %727 = vsyncpa [#allocation3], 1
    %728 = vsyncpa [#allocation6], 1
    %729 = vsyncpa [#allocation4], 1

// kernel: tpu_custom_call.1
$region0: #{tpu_custom_call.1}
  #allocation0 [shape = 'u32[]', space=smem, size = 0x4, offset = 0x4, fixed_abs, tag = 'smem constant byte address 0x4 - core index']
  #allocation1 [shape = 'u32[144,128]{1,0:T(1,128)}', space=vmem, size = 0x12000, scoped, tag = 'internal scratch']
  %s0 = inlined_call_operand.hbm [shape: bf16[2,8,128], index: 0, kind: input, shape index: {}]
  %s1 = inlined_call_operand.hbm [shape: bf16[128,384], index: 1, kind: input, shape index: {}]
  %s2 = inlined_call_operand.vmem [shape: f32[1,384], index: 2, kind: input, shape index: {}]
  %s3 = inlined_call_operand.hbm [shape: bf16[128,128], index: 3, kind: input, shape index: {}]
  %s4 = inlined_call_operand.vmem [shape: f32[1,128], index: 4, kind: input, shape index: {}]
  %s5 = inlined_call_operand.vmem [shape: f32[1,128], index: 5, kind: input, shape index: {}]
  %s6 = inlined_call_operand.vmem [shape: f32[1,128], index: 6, kind: input, shape index: {}]
  %s7 = inlined_call_operand.hbm [shape: bf16[2,8,128], index: 7, kind: output, shape index: {}]
  %s8 = sld [smem:[#allocation0]]
  $region50: #{tpu_custom_call.1} parent=0
    _
  %s10 = ssub.s32 1, %s8
  %s11 = scalar_select 0, %s10, %s8
  $region1: #{tpu_custom_call.1} parent=0
    #allocation2 [shape = 'u8[4096]{0}', space=vmem, size = 0x1000, scoped, tag = 'input window, operand 0, single buffered']
    #allocation3 [shape = 's32[1]{0}', space=sflag, size = 0x4, scoped, tag = 'scoped memory for tpu_custom_call.1']
    #allocation4 [shape = 's32[1]{0}', space=sflag, size = 0x4, scoped, tag = 'scoped memory for tpu_custom_call.1']
    #allocation5 [shape = 'u8[98304]{0}', space=vmem, size = 0x18000, scoped, tag = 'input window, operand 1, single buffered']
    #allocation6 [shape = 's32[1]{0}', space=sflag, size = 0x4, scoped, tag = 'scoped memory for tpu_custom_call.1']
    #allocation7 [shape = 'u8[32768]{0}', space=vmem, size = 0x8000, scoped, tag = 'input window, operand 3, single buffered']
    #allocation8 [shape = 'u8[4096]{0}', space=vmem, size = 0x1000, scoped, tag = 'output window, operand 0, single buffered']
    %12 = vsyncpa [#allocation3], 0
    %13 = vsyncpa [#allocation6], 0
    %14 = vsyncpa [#allocation4], 0
    // Predicated region
    $region2: #{tpu_custom_call.1} parent=1 // pred_check
      _
    $region3: #{tpu_custom_call.1} parent=1 // pred_check_branch
      %16 = sbr.rel (0) target = $region5
    $region4: #{tpu_custom_call.1} parent=1 // pred_region
      %s18 = ssub.s32 128, 128
      %19 = vsyncadd [#allocation3], %s18
      %s20 = sshll.u32 [#allocation2], 4
      %s21 = int_to_ptr.vmem [resolvable:$true] %s20
      %26 = dma.hbm_to_vmem [thread:$0]  %s0, 128, %s21, [#allocation3], 64, 64, 4
    $region5: #{tpu_custom_call.1} parent=1 // pred_fallthru
      _
    // Predicated region
    $region6: #{tpu_custom_call.1} parent=1 // pred_check
      _
    $region7: #{tpu_custom_call.1} parent=1 // pred_check_branch
      %28 = sbr.rel (0) target = $region9
    $region8: #{tpu_custom_call.1} parent=1 // pred_region
      %s30 = ssub.s32 3072, 3072
      %31 = vsyncadd [#allocation6], %s30
      %s32 = sshll.u32 [#allocation5], 4
      %s33 = int_to_ptr.vmem [resolvable:$true] %s32
      %38 = dma.hbm_to_vmem [thread:$0]  %s1, 3072, %s33, [#allocation6], 192, 192, 12
    $region9: #{tpu_custom_call.1} parent=1 // pred_fallthru
      _
    // Predicated region
    $region10: #{tpu_custom_call.1} parent=1 // pred_check
      _
    $region11: #{tpu_custom_call.1} parent=1 // pred_check_branch
      %40 = sbr.rel (0) target = $region13
    $region12: #{tpu_custom_call.1} parent=1 // pred_region
      _
    $region13: #{tpu_custom_call.1} parent=1 // pred_fallthru
      _
    // Predicated region
    $region14: #{tpu_custom_call.1} parent=1 // pred_check
      _
    $region15: #{tpu_custom_call.1} parent=1 // pred_check_branch
      %42 = sbr.rel (0) target = $region17
    $region16: #{tpu_custom_call.1} parent=1 // pred_region
      %s44 = ssub.s32 1024, 1024
      %45 = vsyncadd [#allocation6], %s44
      %s46 = sshll.u32 [#allocation7], 4
      %s47 = int_to_ptr.vmem [resolvable:$true] %s46
      %52 = dma.hbm_to_vmem [thread:$0]  %s3, 1024, %s47, [#allocation6], 64, 64, 4
    $region17: #{tpu_custom_call.1} parent=1 // pred_fallthru
      _
    // Predicated region
    $region18: #{tpu_custom_call.1} parent=1 // pred_check
      _
    $region19: #{tpu_custom_call.1} parent=1 // pred_check_branch
      %54 = sbr.rel (0) target = $region21
    $region20: #{tpu_custom_call.1} parent=1 // pred_region
      _
    $region21: #{tpu_custom_call.1} parent=1 // pred_fallthru
      _
    // Predicated region
    $region22: #{tpu_custom_call.1} parent=1 // pred_check
      _
    $region23: #{tpu_custom_call.1} parent=1 // pred_check_branch
      %56 = sbr.rel (0) target = $region25
    $region24: #{tpu_custom_call.1} parent=1 // pred_region
      _
    $region25: #{tpu_custom_call.1} parent=1 // pred_fallthru
      _
    // Predicated region
    $region26: #{tpu_custom_call.1} parent=1 // pred_check
      _
    $region27: #{tpu_custom_call.1} parent=1 // pred_check_branch
      %58 = sbr.rel (0) target = $region29
    $region28: #{tpu_custom_call.1} parent=1 // pred_region
      _
    $region29: #{tpu_custom_call.1} parent=1 // pred_fallthru
      _
    // Predicated region
    $region30: #{tpu_custom_call.1} parent=1 // pred_check
      _
    $region31: #{tpu_custom_call.1} parent=1 // pred_check_branch
      %60 = sbr.rel (0) target = $region33
    $region32: #{tpu_custom_call.1} parent=1 // pred_region
      %61 = dma.done [#allocation3], 128
    $region33: #{tpu_custom_call.1} parent=1 // pred_fallthru
      _
    // Predicated region
    $region34: #{tpu_custom_call.1} parent=1 // pred_check
      _
    $region35: #{tpu_custom_call.1} parent=1 // pred_check_branch
      %63 = sbr.rel (0) target = $region37
    $region36: #{tpu_custom_call.1} parent=1 // pred_region
      %64 = dma.done [#allocation6], 3072
    $region37: #{tpu_custom_call.1} parent=1 // pred_fallthru
      _
    // Predicated region
    $region38: #{tpu_custom_call.1} parent=1 // pred_check
      _
    $region39: #{tpu_custom_call.1} parent=1 // pred_check_branch
      %66 = sbr.rel (0) target = $region41
    $region40: #{tpu_custom_call.1} parent=1 // pred_region
      %67 = dma.done [#allocation6], 1024
    $region41: #{tpu_custom_call.1} parent=1 // pred_fallthru
      _
    %v69 = vld [vmem:[#allocation2] sm:$0xf]
    %v70 = vld [vmem:[#allocation2 + $0x4] sm:$0xf]
    %v71 = vld [vmem:[#allocation5] sm:$0xff]
    %v72 = vld [vmem:[#allocation5 + $0x8] sm:$0xf]
    %v73 = vld [vmem:[#allocation5 + $0xc] sm:$0xff]
    %v74 = vld [vmem:[#allocation5 + $0x14] sm:$0xf]
    %v75 = vld [vmem:[#allocation5 + $0x18] sm:$0xff]
    %v76 = vld [vmem:[#allocation5 + $0x20] sm:$0xf]
    %v77 = vld [vmem:[#allocation5 + $0x24] sm:$0xff]
    %v78 = vld [vmem:[#allocation5 + $0x2c] sm:$0xf]
    %v79 = vld [vmem:[#allocation5 + $0x30] sm:$0xff]
    %v80 = vld [vmem:[#allocation5 + $0x38] sm:$0xf]
    %v81 = vld [vmem:[#allocation5 + $0x3c] sm:$0xff]
    %v82 = vld [vmem:[#allocation5 + $0x44] sm:$0xf]
    %v83 = vld [vmem:[#allocation5 + $0x48] sm:$0xff]
    %v84 = vld [vmem:[#allocation5 + $0x50] sm:$0xf]
    %v85 = vld [vmem:[#allocation5 + $0x54] sm:$0xff]
    %v86 = vld [vmem:[#allocation5 + $0x5c] sm:$0xf]
    %v87 = vld [vmem:[#allocation5 + $0x60] sm:$0xff]
    %v88 = vld [vmem:[#allocation5 + $0x68] sm:$0xf]
    %v89 = vld [vmem:[#allocation5 + $0x6c] sm:$0xff]
    %v90 = vld [vmem:[#allocation5 + $0x74] sm:$0xf]
    %v91 = vld [vmem:[#allocation5 + $0x78] sm:$0xff]
    %v92 = vld [vmem:[#allocation5 + $0x80] sm:$0xf]
    %v93 = vld [vmem:[#allocation5 + $0x84] sm:$0xff]
    %v94 = vld [vmem:[#allocation5 + $0x8c] sm:$0xf]
    %v95 = vld [vmem:[#allocation5 + $0x90] sm:$0xff]
    %v96 = vld [vmem:[#allocation5 + $0x98] sm:$0xf]
    %v97 = vld [vmem:[#allocation5 + $0x9c] sm:$0xff]
    %v98 = vld [vmem:[#allocation5 + $0xa4] sm:$0xf]
    %v99 = vld [vmem:[#allocation5 + $0xa8] sm:$0xff]
    %v100 = vld [vmem:[#allocation5 + $0xb0] sm:$0xf]
    %v101 = vld [vmem:[#allocation5 + $0xb4] sm:$0xff]
    %v102 = vld [vmem:[#allocation5 + $0xbc] sm:$0xf]
    %v103 = vld [vmem:[%s2] sm:$0x7]
    %v105 = vlaneseq
    %v106 = vshrl.u32 %v105, 7
    %v107 = vsub.s32 0, %v106
    %v108 = vrot.slane %v103, %v107
    %v109 = vlaneseq
    %v110 = vshrl.u32 %v109, 7
    %v111 = vsub.s32 1, %v110
    %v112 = vrot.slane %v103, %v111
    %v113 = vlaneseq
    %v114 = vshrl.u32 %v113, 7
    %v115 = vsub.s32 2, %v114
    %v116 = vrot.slane %v103, %v115
    %v122 = vunpack.c.l.b16 %v69
    %v123 = vunpack.c.l.b16 %v70
    %v124 = vpack.c.b16 %v123, %v122
    %v158 = vunpack.c.l.b16 %v71
    %v159 = vunpack.c.h.b16 %v71
    %v160 = vunpack.c.l.b16 %v72
    %v161 = vunpack.c.l.b16 %v73
    %v162 = vunpack.c.h.b16 %v73
    %v163 = vunpack.c.l.b16 %v74
    %v164 = vunpack.c.l.b16 %v75
    %v165 = vunpack.c.h.b16 %v75
    %v166 = vunpack.c.l.b16 %v76
    %v167 = vunpack.c.l.b16 %v77
    %v168 = vunpack.c.h.b16 %v77
    %v169 = vunpack.c.l.b16 %v78
    %v170 = vunpack.c.l.b16 %v79
    %v171 = vunpack.c.h.b16 %v79
    %v172 = vunpack.c.l.b16 %v80
    %v173 = vunpack.c.l.b16 %v81
    %v174 = vunpack.c.h.b16 %v81
    %v175 = vunpack.c.l.b16 %v82
    %v176 = vunpack.c.l.b16 %v83
    %v177 = vunpack.c.h.b16 %v83
    %v178 = vunpack.c.l.b16 %v84
    %v179 = vunpack.c.l.b16 %v85
    %v180 = vunpack.c.h.b16 %v85
    %v181 = vunpack.c.l.b16 %v86
    %v182 = vunpack.c.l.b16 %v87
    %v183 = vunpack.c.h.b16 %v87
    %v184 = vunpack.c.l.b16 %v88
    %v185 = vunpack.c.l.b16 %v89
    %v186 = vunpack.c.h.b16 %v89
    %v187 = vunpack.c.l.b16 %v90
    %v188 = vunpack.c.l.b16 %v91
    %v189 = vunpack.c.h.b16 %v91
    %v190 = vunpack.c.l.b16 %v92
    %v191 = vunpack.c.l.b16 %v93
    %v192 = vunpack.c.h.b16 %v93
    %v193 = vunpack.c.l.b16 %v94
    %v194 = vunpack.c.l.b16 %v95
    %v195 = vunpack.c.h.b16 %v95
    %v196 = vunpack.c.l.b16 %v96
    %v197 = vunpack.c.l.b16 %v97
    %v198 = vunpack.c.h.b16 %v97
    %v199 = vunpack.c.l.b16 %v98
    %v200 = vunpack.c.l.b16 %v99
    %v201 = vunpack.c.h.b16 %v99
    %v202 = vunpack.c.l.b16 %v100
    %v203 = vunpack.c.l.b16 %v101
    %v204 = vunpack.c.h.b16 %v101
    %v205 = vunpack.c.l.b16 %v102
    %v206 = vpack.c.b16 %v161, %v158
    %v207 = vpack.c.b16 %v162, %v159
    %v208 = vpack.c.b16 %v163, %v160
    %v209 = vpack.c.b16 %v167, %v164
    %v210 = vpack.c.b16 %v168, %v165
    %v211 = vpack.c.b16 %v169, %v166
    %v212 = vpack.c.b16 %v173, %v170
    %v213 = vpack.c.b16 %v174, %v171
    %v214 = vpack.c.b16 %v175, %v172
    %v215 = vpack.c.b16 %v179, %v176
    %v216 = vpack.c.b16 %v180, %v177
    %v217 = vpack.c.b16 %v181, %v178
    %v218 = vpack.c.b16 %v185, %v182
    %v219 = vpack.c.b16 %v186, %v183
    %v220 = vpack.c.b16 %v187, %v184
    %v221 = vpack.c.b16 %v191, %v188
    %v222 = vpack.c.b16 %v192, %v189
    %v223 = vpack.c.b16 %v193, %v190
    %v224 = vpack.c.b16 %v197, %v194
    %v225 = vpack.c.b16 %v198, %v195
    %v226 = vpack.c.b16 %v199, %v196
    %v227 = vpack.c.b16 %v203, %v200
    %v228 = vpack.c.b16 %v204, %v201
    %v229 = vpack.c.b16 %v205, %v202
    %254 = vmatprep.subr.bf16.mxu0 %v228
    %255 = vmatpush1.bf16.msra.mxu0 %v227
    %256 = vmatprep.subr.bf16.mxu0 %v225
    %257 = vmatpush1.bf16.msra.mxu0 %v224
    %258 = vmatprep.subr.bf16.mxu0 %v222
    %259 = vmatpush1.bf16.msra.mxu0 %v221
    %260 = vmatprep.subr.bf16.mxu0 %v219
    %261 = vmatpush1.bf16.msra.mxu0 %v218
    %262 = vmatprep.subr.bf16.mxu0 %v216
    %263 = vmatpush1.bf16.msra.mxu0 %v215
    %264 = vmatprep.subr.bf16.mxu0 %v213
    %265 = vmatpush1.bf16.msra.mxu0 %v212
    %266 = vmatprep.subr.bf16.mxu0 %v210
    %267 = vmatpush1.bf16.msra.mxu0 %v209
    %268 = vmatprep.subr.bf16.mxu0 %v207
    %269 = vmatpush1.bf16.msra.mxu0 %v206
    %270 = vmatprep.subr.bf16.mxu0 0
    %271 = vmatpush2.bf16.msra.mxu0 0
    %272 = vmatprep.subr.bf16.mxu0 0
    %273 = vmatpush2.bf16.msra.mxu0 0
    %274 = vmatprep.subr.bf16.mxu0 0
    %275 = vmatpush2.bf16.msra.mxu0 0
    %276 = vmatprep.subr.bf16.mxu0 0
    %277 = vmatpush2.bf16.msra.mxu0 0
    %278 = vmatprep.subr.bf16.mxu0 0
    %279 = vmatpush2.bf16.msra.mxu0 0
    %280 = vmatprep.subr.bf16.mxu0 0
    %281 = vmatpush2.bf16.msra.mxu0 0
    %282 = vmatprep.subr.bf16.mxu0 0
    %283 = vmatpush2.bf16.msra.mxu0 0
    %284 = vmatprep.subr.bf16.mxu0 0
    %285 = vmatpush2.bf16.msra.mxu0 0
    %286 = vmatprep.mubr.bf16.mxu0 0
    %287 = vmatmul.mubr.bf16.gmra.mxu0 %v124
    %v288 = vpop.f32.mrf.mxu0
    %v289 = vadd.f32 %v108, %v288
    %v290 = vpop.f32.mrf.mxu0
    %v291 = vadd.f32 %v112, %v290
    %v292 = vpop.f32.mrf.mxu0
    %v293 = vadd.f32 %v108, %v292
    %v294 = vpop.f32.mrf.mxu0
    %v295 = vadd.f32 %v112, %v294
    %296 = vdwg.mxu0
    %297 = vmatprep.subr.bf16.mxu0 0
    %298 = vmatpush1.bf16.msra.mxu0 %v229
    %299 = vmatprep.subr.bf16.mxu0 0
    %300 = vmatpush1.bf16.msra.mxu0 %v226
    %301 = vmatprep.subr.bf16.mxu0 0
    %302 = vmatpush1.bf16.msra.mxu0 %v223
    %303 = vmatprep.subr.bf16.mxu0 0
    %304 = vmatpush1.bf16.msra.mxu0 %v220
    %305 = vmatprep.subr.bf16.mxu0 0
    %306 = vmatpush1.bf16.msra.mxu0 %v217
    %307 = vmatprep.subr.bf16.mxu0 0
    %308 = vmatpush1.bf16.msra.mxu0 %v214
    %309 = vmatprep.subr.bf16.mxu0 0
    %310 = vmatpush1.bf16.msra.mxu0 %v211
    %311 = vmatprep.subr.bf16.mxu0 0
    %312 = vmatpush1.bf16.msra.mxu0 %v208
    %313 = vmatprep.subr.bf16.mxu0 0
    %314 = vmatpush2.bf16.msra.mxu0 0
    %315 = vmatprep.subr.bf16.mxu0 0
    %316 = vmatpush2.bf16.msra.mxu0 0
    %317 = vmatprep.subr.bf16.mxu0 0
    %318 = vmatpush2.bf16.msra.mxu0 0
    %319 = vmatprep.subr.bf16.mxu0 0
    %320 = vmatpush2.bf16.msra.mxu0 0
    %321 = vmatprep.subr.bf16.mxu0 0
    %322 = vmatpush2.bf16.msra.mxu0 0
    %323 = vmatprep.subr.bf16.mxu0 0
    %324 = vmatpush2.bf16.msra.mxu0 0
    %325 = vmatprep.subr.bf16.mxu0 0
    %326 = vmatpush2.bf16.msra.mxu0 0
    %327 = vmatprep.subr.bf16.mxu0 0
    %328 = vmatpush2.bf16.msra.mxu0 0
    %329 = vmatprep.mubr.bf16.mxu0 0
    %330 = vmatmul.mubr.bf16.gmra.mxu0 %v124
    %v331 = vpop.f32.mrf.mxu0
    %v332 = vadd.f32 %v116, %v331
    %v333 = vpop.f32.mrf.mxu0
    %v334 = vpop.f32.mrf.mxu0
    %v335 = vadd.f32 %v116, %v334
    %v336 = vpop.f32.mrf.mxu0
    %337 = vdwg.mxu0
    %v338 = vpack.c.bf16 %v289, %v289
    %v339 = vpack.c.bf16 %v293, %v293
    %v340 = vpack.c.bf16 %v291, %v291
    %v341 = vpack.c.bf16 %v295, %v295
    %v342 = vpack.c.bf16 %v332, %v332
    %v343 = vpack.c.bf16 %v335, %v335
    %344 = vmatprep.subr.bf16.mxu0 0
    %345 = vmatpush1.bf16.xpose.msra.mxu0 0
    %346 = vmatprep.subr.bf16.mxu0 0
    %347 = vmatpush1.bf16.xpose.msra.mxu0 0
    %348 = vmatprep.subr.bf16.mxu0 0
    %349 = vmatpush1.bf16.xpose.msra.mxu0 0
    %350 = vmatprep.subr.bf16.mxu0 0
    %351 = vmatpush1.bf16.xpose.msra.mxu0 0
    %352 = vmatprep.subr.bf16.mxu0 0
    %353 = vmatpush1.bf16.xpose.msra.mxu0 0
    %354 = vmatprep.subr.bf16.mxu0 0
    %355 = vmatpush1.bf16.xpose.msra.mxu0 0
    %356 = vmatprep.subr.bf16.mxu0 0
    %357 = vmatpush1.bf16.xpose.msra.mxu0 0
    %358 = vmatprep.subr.bf16.mxu0 0
    %359 = vmatpush1.bf16.xpose.msra.mxu0 %v340
    %360 = vmatprep.subr.bf16.mxu0 0
    %361 = vmatpush2.bf16.xpose.msra.mxu0 0
    %362 = vmatprep.subr.bf16.mxu0 0
    %363 = vmatpush2.bf16.xpose.msra.mxu0 0
    %364 = vmatprep.subr.bf16.mxu0 0
    %365 = vmatpush2.bf16.xpose.msra.mxu0 0
    %366 = vmatprep.subr.bf16.mxu0 0
    %367 = vmatpush2.bf16.xpose.msra.mxu0 0
    %368 = vmatprep.subr.bf16.mxu0 0
    %369 = vmatpush2.bf16.xpose.msra.mxu0 0
    %370 = vmatprep.subr.bf16.mxu0 0
    %371 = vmatpush2.bf16.xpose.msra.mxu0 0
    %372 = vmatprep.subr.bf16.mxu0 0
    %373 = vmatpush2.bf16.xpose.msra.mxu0 0
    %374 = vmatprep.subr.bf16.mxu0 0
    %375 = vmatpush2.bf16.xpose.msra.mxu0 0
    %376 = vmatprep.mubr.bf16.mxu0 0
    %377 = vmatmul.mubr.bf16.gmra.mxu0 %v338
    %v378 = vpop.f32.mrf.mxu0
    %v379 = vadd.f32 0.0, %v378
    %v380 = vpop.f32.mrf.mxu0
    %v381 = vpop.f32.mrf.mxu0
    %v382 = vpop.f32.mrf.mxu0
    %383 = vdwg.mxu0
    %384 = vmatprep.subr.bf16.mxu0 0
    %385 = vmatpush1.bf16.xpose.msra.mxu0 0
    %386 = vmatprep.subr.bf16.mxu0 0
    %387 = vmatpush1.bf16.xpose.msra.mxu0 0
    %388 = vmatprep.subr.bf16.mxu0 0
    %389 = vmatpush1.bf16.xpose.msra.mxu0 0
    %390 = vmatprep.subr.bf16.mxu0 0
    %391 = vmatpush1.bf16.xpose.msra.mxu0 0
    %392 = vmatprep.subr.bf16.mxu0 0
    %393 = vmatpush1.bf16.xpose.msra.mxu0 0
    %394 = vmatprep.subr.bf16.mxu0 0
    %395 = vmatpush1.bf16.xpose.msra.mxu0 0
    %396 = vmatprep.subr.bf16.mxu0 0
    %397 = vmatpush1.bf16.xpose.msra.mxu0 0
    %398 = vmatprep.subr.bf16.mxu0 0
    %399 = vmatpush1.bf16.xpose.msra.mxu0 %v341
    %400 = vmatprep.subr.bf16.mxu0 0
    %401 = vmatpush2.bf16.xpose.msra.mxu0 0
    %402 = vmatprep.subr.bf16.mxu0 0
    %403 = vmatpush2.bf16.xpose.msra.mxu0 0
    %404 = vmatprep.subr.bf16.mxu0 0
    %405 = vmatpush2.bf16.xpose.msra.mxu0 0
    %406 = vmatprep.subr.bf16.mxu0 0
    %407 = vmatpush2.bf16.xpose.msra.mxu0 0
    %408 = vmatprep.subr.bf16.mxu0 0
    %409 = vmatpush2.bf16.xpose.msra.mxu0 0
    %410 = vmatprep.subr.bf16.mxu0 0
    %411 = vmatpush2.bf16.xpose.msra.mxu0 0
    %412 = vmatprep.subr.bf16.mxu0 0
    %413 = vmatpush2.bf16.xpose.msra.mxu0 0
    %414 = vmatprep.subr.bf16.mxu0 0
    %415 = vmatpush2.bf16.xpose.msra.mxu0 0
    %416 = vmatprep.mubr.bf16.mxu0 0
    %417 = vmatmul.mubr.bf16.gmra.mxu0 %v339
    %v418 = vpop.f32.mrf.mxu0
    %v419 = vadd.f32 0.0, %v418
    %v420 = vpop.f32.mrf.mxu0
    %v421 = vpop.f32.mrf.mxu0
    %v422 = vpop.f32.mrf.mxu0
    %423 = vdwg.mxu0
    %vm424 = vcmask 64512
    %v425 = vsel %vm424, %v379, -inf
    %426 = vmax.xlane.f32.xlu0 %v425
    %v427 = vpop.xlane.xlu0 %426
    %v428 = vsel %vm424, %v419, -inf
    %429 = vmax.xlane.f32.xlu0 %v428
    %v430 = vpop.xlane.xlu0 %429
    %v431 = vsub.f32 %v379, %v427
    %v432 = vsub.f32 %v419, %v430
    %v433 = vmul.f32 %v431, 1.442695
    %v434 = vpow.pop %v433
    %v435 = vmul.f32 %v432, 1.442695
    %v436 = vpow.pop %v435
    %v437 = vsel %vm424, %v434, 0.0
    %438 = vadd.xlane.f32.xlu0 %v437
    %v439 = vpop.xlane.xlu0 %438
    %v440 = vsel %vm424, %v436, 0.0
    %441 = vadd.xlane.f32.xlu0 %v440
    %v442 = vpop.xlane.xlu0 %441
    %v443 = vrcp.pop %v439
    %v444 = vrcp.pop %v442
    %v445 = vmul.f32 %v434, %v443
    %v446 = vmul.f32 %v436, %v444
    %v447 = vpack.c.bf16 %v445, %v445
    %v448 = vpack.c.bf16 %v446, %v446
    %v450 = vsel %vm424, %v447, 0
    %vm452 = vcmask 1043456
    %v454 = vsel %vm452, %v342, 0
    %456 = vmatprep.subr.bf16.mxu0 0
    %457 = vmatpush1.bf16.msra.mxu0 0
    %458 = vmatprep.subr.bf16.mxu0 0
    %459 = vmatpush1.bf16.msra.mxu0 0
    %460 = vmatprep.subr.bf16.mxu0 0
    %461 = vmatpush1.bf16.msra.mxu0 0
    %462 = vmatprep.subr.bf16.mxu0 0
    %463 = vmatpush1.bf16.msra.mxu0 0
    %464 = vmatprep.subr.bf16.mxu0 0
    %465 = vmatpush1.bf16.msra.mxu0 0
    %466 = vmatprep.subr.bf16.mxu0 0
    %467 = vmatpush1.bf16.msra.mxu0 0
    %468 = vmatprep.subr.bf16.mxu0 0
    %469 = vmatpush1.bf16.msra.mxu0 0
    %470 = vmatprep.subr.bf16.mxu0 0
    %471 = vmatpush1.bf16.msra.mxu0 %v454
    %472 = vmatprep.subr.bf16.mxu0 0
    %473 = vmatpush2.bf16.msra.mxu0 0
    %474 = vmatprep.subr.bf16.mxu0 0
    %475 = vmatpush2.bf16.msra.mxu0 0
    %476 = vmatprep.subr.bf16.mxu0 0
    %477 = vmatpush2.bf16.msra.mxu0 0
    %478 = vmatprep.subr.bf16.mxu0 0
    %479 = vmatpush2.bf16.msra.mxu0 0
    %480 = vmatprep.subr.bf16.mxu0 0
    %481 = vmatpush2.bf16.msra.mxu0 0
    %482 = vmatprep.subr.bf16.mxu0 0
    %483 = vmatpush2.bf16.msra.mxu0 0
    %484 = vmatprep.subr.bf16.mxu0 0
    %485 = vmatpush2.bf16.msra.mxu0 0
    %486 = vmatprep.subr.bf16.mxu0 0
    %487 = vmatpush2.bf16.msra.mxu0 0
    %488 = vmatprep.mubr.bf16.mxu0 0
    %489 = vmatmul.mubr.bf16.gmra.mxu0 %v450
    %v490 = vpop.f32.mrf.mxu0
    %v491 = vadd.f32 0.0, %v490
    %v492 = vpop.f32.mrf.mxu0
    %v493 = vpop.f32.mrf.mxu0
    %v494 = vpop.f32.mrf.mxu0
    %495 = vdwg.mxu0
    %v497 = vsel %vm424, %v448, 0
    %v500 = vsel %vm452, %v343, 0
    %502 = vmatprep.subr.bf16.mxu0 0
    %503 = vmatpush1.bf16.msra.mxu0 0
    %504 = vmatprep.subr.bf16.mxu0 0
    %505 = vmatpush1.bf16.msra.mxu0 0
    %506 = vmatprep.subr.bf16.mxu0 0
    %507 = vmatpush1.bf16.msra.mxu0 0
    %508 = vmatprep.subr.bf16.mxu0 0
    %509 = vmatpush1.bf16.msra.mxu0 0
    %510 = vmatprep.subr.bf16.mxu0 0
    %511 = vmatpush1.bf16.msra.mxu0 0
    %512 = vmatprep.subr.bf16.mxu0 0
    %513 = vmatpush1.bf16.msra.mxu0 0
    %514 = vmatprep.subr.bf16.mxu0 0
    %515 = vmatpush1.bf16.msra.mxu0 0
    %516 = vmatprep.subr.bf16.mxu0 0
    %517 = vmatpush1.bf16.msra.mxu0 %v500
    %518 = vmatprep.subr.bf16.mxu0 0
    %519 = vmatpush2.bf16.msra.mxu0 0
    %520 = vmatprep.subr.bf16.mxu0 0
    %521 = vmatpush2.bf16.msra.mxu0 0
    %522 = vmatprep.subr.bf16.mxu0 0
    %523 = vmatpush2.bf16.msra.mxu0 0
    %524 = vmatprep.subr.bf16.mxu0 0
    %525 = vmatpush2.bf16.msra.mxu0 0
    %526 = vmatprep.subr.bf16.mxu0 0
    %527 = vmatpush2.bf16.msra.mxu0 0
    %528 = vmatprep.subr.bf16.mxu0 0
    %529 = vmatpush2.bf16.msra.mxu0 0
    %530 = vmatprep.subr.bf16.mxu0 0
    %531 = vmatpush2.bf16.msra.mxu0 0
    %532 = vmatprep.subr.bf16.mxu0 0
    %533 = vmatpush2.bf16.msra.mxu0 0
    %534 = vmatprep.mubr.bf16.mxu0 0
    %535 = vmatmul.mubr.bf16.gmra.mxu0 %v497
    %v536 = vpop.f32.mrf.mxu0
    %v537 = vadd.f32 0.0, %v536
    %v538 = vpop.f32.mrf.mxu0
    %v539 = vpop.f32.mrf.mxu0
    %v540 = vpop.f32.mrf.mxu0
    %541 = vdwg.mxu0
    %v542 = vpack.c.bf16 %v537, %v491
    %v543 = vld [vmem:[#allocation7] sm:$0xf]
    %v544 = vld [vmem:[#allocation7 + $0x4] sm:$0xf]
    %v545 = vld [vmem:[#allocation7 + $0x8] sm:$0xf]
    %v546 = vld [vmem:[#allocation7 + $0xc] sm:$0xf]
    %v547 = vld [vmem:[#allocation7 + $0x10] sm:$0xf]
    %v548 = vld [vmem:[#allocation7 + $0x14] sm:$0xf]
    %v549 = vld [vmem:[#allocation7 + $0x18] sm:$0xf]
    %v550 = vld [vmem:[#allocation7 + $0x1c] sm:$0xf]
    %v551 = vld [vmem:[#allocation7 + $0x20] sm:$0xf]
    %v552 = vld [vmem:[#allocation7 + $0x24] sm:$0xf]
    %v553 = vld [vmem:[#allocation7 + $0x28] sm:$0xf]
    %v554 = vld [vmem:[#allocation7 + $0x2c] sm:$0xf]
    %v555 = vld [vmem:[#allocation7 + $0x30] sm:$0xf]
    %v556 = vld [vmem:[#allocation7 + $0x34] sm:$0xf]
    %v557 = vld [vmem:[#allocation7 + $0x38] sm:$0xf]
    %v558 = vld [vmem:[#allocation7 + $0x3c] sm:$0xf]
    %v559 = vld [vmem:[%s4] sm:$0x1]
    %v561 = vlaneseq
    %v562 = vshrl.u32 %v561, 7
    %v563 = vsub.s32 0, %v562
    %v564 = vrot.slane %v559, %v563
    %v582 = vunpack.c.l.b16 %v543
    %v583 = vunpack.c.l.b16 %v544
    %v584 = vunpack.c.l.b16 %v545
    %v585 = vunpack.c.l.b16 %v546
    %v586 = vunpack.c.l.b16 %v547
    %v587 = vunpack.c.l.b16 %v548
    %v588 = vunpack.c.l.b16 %v549
    %v589 = vunpack.c.l.b16 %v550
    %v590 = vunpack.c.l.b16 %v551
    %v591 = vunpack.c.l.b16 %v552
    %v592 = vunpack.c.l.b16 %v553
    %v593 = vunpack.c.l.b16 %v554
    %v594 = vunpack.c.l.b16 %v555
    %v595 = vunpack.c.l.b16 %v556
    %v596 = vunpack.c.l.b16 %v557
    %v597 = vunpack.c.l.b16 %v558
    %v598 = vpack.c.b16 %v583, %v582
    %v599 = vpack.c.b16 %v585, %v584
    %v600 = vpack.c.b16 %v587, %v586
    %v601 = vpack.c.b16 %v589, %v588
    %v602 = vpack.c.b16 %v591, %v590
    %v603 = vpack.c.b16 %v593, %v592
    %v604 = vpack.c.b16 %v595, %v594
    %v605 = vpack.c.b16 %v597, %v596
    %614 = vmatprep.subr.bf16.mxu0 0
    %615 = vmatpush1.bf16.msra.mxu0 %v605
    %616 = vmatprep.subr.bf16.mxu0 0
    %617 = vmatpush1.bf16.msra.mxu0 %v604
    %618 = vmatprep.subr.bf16.mxu0 0
    %619 = vmatpush1.bf16.msra.mxu0 %v603
    %620 = vmatprep.subr.bf16.mxu0 0
    %621 = vmatpush1.bf16.msra.mxu0 %v602
    %622 = vmatprep.subr.bf16.mxu0 0
    %623 = vmatpush1.bf16.msra.mxu0 %v601
    %624 = vmatprep.subr.bf16.mxu0 0
    %625 = vmatpush1.bf16.msra.mxu0 %v600
    %626 = vmatprep.subr.bf16.mxu0 0
    %627 = vmatpush1.bf16.msra.mxu0 %v599
    %628 = vmatprep.subr.bf16.mxu0 0
    %629 = vmatpush1.bf16.msra.mxu0 %v598
    %630 = vmatprep.subr.bf16.mxu0 0
    %631 = vmatpush2.bf16.msra.mxu0 0
    %632 = vmatprep.subr.bf16.mxu0 0
    %633 = vmatpush2.bf16.msra.mxu0 0
    %634 = vmatprep.subr.bf16.mxu0 0
    %635 = vmatpush2.bf16.msra.mxu0 0
    %636 = vmatprep.subr.bf16.mxu0 0
    %637 = vmatpush2.bf16.msra.mxu0 0
    %638 = vmatprep.subr.bf16.mxu0 0
    %639 = vmatpush2.bf16.msra.mxu0 0
    %640 = vmatprep.subr.bf16.mxu0 0
    %641 = vmatpush2.bf16.msra.mxu0 0
    %642 = vmatprep.subr.bf16.mxu0 0
    %643 = vmatpush2.bf16.msra.mxu0 0
    %644 = vmatprep.subr.bf16.mxu0 0
    %645 = vmatpush2.bf16.msra.mxu0 0
    %646 = vmatprep.mubr.bf16.mxu0 0
    %647 = vmatmul.mubr.bf16.gmra.mxu0 %v542
    %v648 = vpop.f32.mrf.mxu0
    %v649 = vadd.f32 %v564, %v648
    %v650 = vpop.f32.mrf.mxu0
    %v651 = vpop.f32.mrf.mxu0
    %v652 = vadd.f32 %v564, %v651
    %v653 = vpop.f32.mrf.mxu0
    %654 = vdwg.mxu0
    %v655 = vld [vmem:[#allocation2] sm:$0xf]
    %v656 = vld [vmem:[#allocation2 + $0x4] sm:$0xf]
    %v657 = vunpack.c.l.bf16 %v655
    %v658 = vunpack.c.l.bf16 %v656
    %v659 = vadd.f32 %v649, %v657
    %v660 = vadd.f32 %v652, %v658
    %v661 = vlaneseq
    %v662 = vand.u32 %v661, 127
    %vm663 = vcmp.lt.s32.totalorder %v662, 32
    %v664 = vsel %vm663, 1, 0
    %v665 = vcvt.s32.f32 %v664
    %666 = vadd.xlane.f32.xlu0 %v659
    %v667 = vpop.xlane.xlu0 %666
    %668 = vadd.xlane.f32.xlu0 %v660
    %v669 = vpop.xlane.xlu0 %668
    %v670 = vmul.f32 %v667, 0.03125
    %v671 = vmul.f32 %v669, 0.03125
    %v672 = vsub.f32 %v659, %v670
    %v673 = vsub.f32 %v660, %v671
    %v674 = vmul.f32 %v672, %v665
    %v675 = vmul.f32 %v673, %v665
    %v676 = vmul.f32 %v674, %v674
    %v677 = vmul.f32 %v675, %v675
    %678 = vadd.xlane.f32.xlu0 %v676
    %v679 = vpop.xlane.xlu0 %678
    %680 = vadd.xlane.f32.xlu0 %v677
    %v681 = vpop.xlane.xlu0 %680
    %v682 = vmul.f32 %v679, 0.03125
    %v683 = vmul.f32 %v681, 0.03125
    %v684 = vadd.f32 %v682, 1e-12
    %v685 = vadd.f32 %v683, 1e-12
    %v686 = vrsqrt.pop %v684
    %v687 = vrsqrt.pop %v685
    %v688 = vmul.f32 %v674, %v686
    %v689 = vmul.f32 %v675, %v687
    %v690 = vld [vmem:[%s5] sm:$0x1]
    %v692 = vlaneseq
    %v693 = vshrl.u32 %v692, 7
    %v694 = vsub.s32 0, %v693
    %v695 = vrot.slane %v690, %v694
    %v697 = vmul.f32 %v688, %v695
    %v698 = vmul.f32 %v689, %v695
    %v699 = vld [vmem:[%s6] sm:$0x1]
    %v701 = vlaneseq
    %v702 = vshrl.u32 %v701, 7
    %v703 = vsub.s32 0, %v702
    %v704 = vrot.slane %v699, %v703
    %v706 = vadd.f32 %v697, %v704
    %v707 = vadd.f32 %v698, %v704
    %v708 = vpack.c.bf16 %v706, %v706
    %v709 = vpack.c.bf16 %v707, %v707
    %710 = vst [vmem:[#allocation8] sm:$0xf] %v708
    %711 = vst [vmem:[#allocation8 + $0x4] sm:$0xf] %v709
    // Predicated region
    $region42: #{tpu_custom_call.1} parent=1 // pred_check
      _
    $region43: #{tpu_custom_call.1} parent=1 // pred_check_branch
      %713 = sbr.rel (0) target = $region45
    $region44: #{tpu_custom_call.1} parent=1 // pred_region
      %s715 = ssub.s32 128, 128
      %716 = vsyncadd [#allocation4], %s715
      %s717 = sshll.u32 [#allocation8], 4
      %s718 = int_to_ptr.vmem [resolvable:$true] %s717
      %723 = dma.vmem_to_hbm [thread:$0]  %s718, 128, %s7, [#allocation4], 64, 64, 4
    $region45: #{tpu_custom_call.1} parent=1 // pred_fallthru
      _
    // Predicated region
    $region46: #{tpu_custom_call.1} parent=1 // pred_check
      _
    $region47: #{tpu_custom_call.1} parent=1 // pred_check_branch
      %725 = sbr.rel (0) target = $region49
    $region48: #{tpu_custom_call.1} parent=1 // pred_region
      %726 = dma.done [#allocation4], 128
    $region49: #{tpu_custom_call.1} parent=1 // pred_fallthru
      _
    %727 = vsyncpa [#allocation3], 1
    %728 = vsyncpa [#allocation6], 1
    %729 = vsyncpa [#allocation4], 1

</llo_original>
